<compile_context>
chip_gen: v7x
topology: tpu7x:2x2x1
jax: 0.10.0
libtpu: 0.0.40
codegen_flags: <defaults>
</compile_context>

<pallas_src>
import numpy as np
import jax
import jax.numpy as jnp
from jax import lax
from jax.experimental import pallas as pl
from jax.experimental.pallas import tpu as pltpu


# ----------------------------------------------------------------------------
# Shared helper: one VALID-conv output row as K matmuls of depth K*Cin
# ----------------------------------------------------------------------------
def _conv_row(rows, ws, Wo):
    """rows: list of K (W, Cin) input slabs (rows h..h+K-1), bf16.
    ws:   list of K (K*Cin, Cout) bf16 weight slabs (columns ordered (kw, ci)).
    Returns the output row (Wo, Cout) in f32."""
    K = len(ws)
    Cin = rows[0].shape[-1]
    out = None
    for kh in range(K):
        lhs = jnp.concatenate(
            [lax.slice(rows[kh], (kw, 0), (kw + Wo, Cin)) for kw in range(K)],
            axis=-1).astype(jnp.bfloat16)                       # (Wo, K*Cin)
        part = jnp.dot(lhs, ws[kh], preferred_element_type=jnp.float32)
        out = part if out is None else out + part
    return out                                                  # (Wo, Cout) f32


# ----------------------------------------------------------------------------
# Fused kernel: conv1+ReLU -> VMEM scratch -> conv2+ReLU+avgpool -> fc1/2/3
# ----------------------------------------------------------------------------
def _network_kernel(x_ref, cw1_ref, cb1_ref, cw2_ref, cb2_ref,
                    w1_ref, b1_ref, w2_ref, b2_ref, w3_ref, b3_ref,
                    o_ref, act_ref):
    """x_ref: (1,H,W,3) bf16; cw*_ref: (K, K*Cin, Cout) bf16; cb*_ref: (1,Cout)
    f32; FC weights (in,out) / biases (1,out) f32; o_ref: (1,1,3) f32;
    act_ref: (Ho1, Wo1, 32) bf16 VMEM scratch (conv1 activation, never in HBM)."""
    _, H, W, Cin = x_ref.shape
    K = cw1_ref.shape[0]
    Ho1, Wo1, C1 = act_ref.shape
    C2 = cw2_ref.shape[-1]
    Ho2, Wo2 = Ho1 - K + 1, Wo1 - K + 1

    ws1 = [cw1_ref[kh] for kh in range(K)]     # hoisted (K*Cin, C1) bf16 slabs
    ws2 = [cw2_ref[kh] for kh in range(K)]     # hoisted (K*C1, C2) bf16 slabs
    cb1 = cb1_ref[...]                         # (1, C1)
    cb2 = cb2_ref[...]                         # (1, C2)

    # ---- conv1 + bias + ReLU, one output row per iteration -> VMEM scratch
    def row1(h, carry):
        rows = [x_ref[0, h + kh, :, :] for kh in range(K)]       # (W, Cin) bf16
        res = _conv_row(rows, ws1, Wo1)                          # (Wo1, C1) f32
        act_ref[h, :, :] = jnp.maximum(res + cb1, 0.0).astype(act_ref.dtype)
        return carry

    lax.fori_loop(0, Ho1, row1, 0)

    # ---- conv2 + bias + ReLU + spatial sum (== avg_pool2d(Ho2) after scaling)
    def row2(h, acc):
        rows = [act_ref[h + kh, :, :] for kh in range(K)]        # (Wo1, C1) bf16
        res = jnp.maximum(_conv_row(rows, ws2, Wo2) + cb2, 0.0)  # (Wo2, C2) f32
        return acc + res

    acc = lax.fori_loop(0, Ho2, row2, jnp.zeros((Wo2, C2), jnp.float32))
    pooled = jnp.sum(acc, axis=0, keepdims=True) * (1.0 / float(Ho2 * Wo2))

    # ---- fc1 -> relu -> fc2 -> relu -> fc3
    h1 = jnp.maximum(
        jnp.dot(pooled, w1_ref[...], preferred_element_type=jnp.float32)
        + b1_ref[...], 0.0)
    h2 = jnp.maximum(
        jnp.dot(h1, w2_ref[...], preferred_element_type=jnp.float32)
        + b2_ref[...], 0.0)
    o_ref[0, :, :] = (
        jnp.dot(h2, w3_ref[...], preferred_element_type=jnp.float32) + b3_ref[...])


def network_pallas(x, cw1, cb1, cw2, cb2, fw1, fb1, fw2, fb2, fw3, fb3):
    """x: (N,H,W,3) bf16 NHWC.  Returns (N, 3) f32."""
    N, H, W, Cin = x.shape
    K, KCin, C1 = cw1.shape
    C2 = cw2.shape[-1]
    Ho1, Wo1 = H - K + 1, W - K + 1
    D1, D2, D3 = fw1.shape[1], fw2.shape[1], fw3.shape[1]

    out = pl.pallas_call(
        _network_kernel,
        out_shape=jax.ShapeDtypeStruct((N, 1, D3), jnp.float32),
        grid_spec=pltpu.PrefetchScalarGridSpec(
            num_scalar_prefetch=0,
            grid=(N,),
            in_specs=[
                pl.BlockSpec((1, H, W, Cin), lambda n: (n, 0, 0, 0)),
                pl.BlockSpec((K, KCin, C1), lambda n: (0, 0, 0)),
                pl.BlockSpec((1, C1), lambda n: (0, 0)),
                pl.BlockSpec((K, K * C1, C2), lambda n: (0, 0, 0)),
                pl.BlockSpec((1, C2), lambda n: (0, 0)),
                pl.BlockSpec((C2, D1), lambda n: (0, 0)),
                pl.BlockSpec((1, D1), lambda n: (0, 0)),
                pl.BlockSpec((D1, D2), lambda n: (0, 0)),
                pl.BlockSpec((1, D2), lambda n: (0, 0)),
                pl.BlockSpec((D2, D3), lambda n: (0, 0)),
                pl.BlockSpec((1, D3), lambda n: (0, 0)),
            ],
            out_specs=pl.BlockSpec((1, 1, D3), lambda n: (n, 0, 0)),
            scratch_shapes=[pltpu.VMEM((Ho1, Wo1, C1), jnp.bfloat16)],
        ),
        compiler_params=pltpu.CompilerParams(
            dimension_semantics=("parallel",),
            vmem_limit_bytes=32 * 1024 * 1024),
    )(x, cw1, cb1, cw2, cb2, fw1, fb1, fw2, fb2, fw3, fb3)
    return out[:, 0, :]                                          # squeeze -> (N, 3)


# ----------------------------------------------------------------------------
# NETWORK.forward (Pallas) and parameter initialization
# ----------------------------------------------------------------------------
def _conv_mat(w):
    """OIHW -> (kh, kw, ci, co) -> (K, K*Cin, Cout), bf16 (wrapper glue)."""
    co, ci, kh, kw = w.shape
    return (jnp.transpose(w, (2, 3, 1, 0))
            .reshape(kh, kw * ci, co)
            .astype(jnp.bfloat16))


def network_forward(x_nchw, p):
    """Forward pass of NETWORK.  Input is NCHW float32, output (N, 3) float32."""
    K = p["conv1_w"].shape[-1]
    # NCHW -> NHWC + bf16 cast (glue; the kernel matmuls use bf16 LHS anyway).
    x = jnp.transpose(x_nchw, (0, 2, 3, 1)).astype(jnp.bfloat16)
    N, H, W, _ = x.shape

    # nn.functional.avg_pool2d(..., 124): conv2 feature map must be 124x124.
    assert H - 2 * (K - 1) == 124 and W - 2 * (K - 1) == 124, (H, W, K)

    cw1 = _conv_mat(p["conv1_w"])                                # (K, K*3, 32) bf16
    cw2 = _conv_mat(p["conv2_w"])                                # (K, K*32, 64) bf16

    return network_pallas(
        x,
        cw1, p["conv1_b"].reshape(1, -1),
        cw2, p["conv2_b"].reshape(1, -1),
        p["fc1_w"].T, p["fc1_b"].reshape(1, -1),
        p["fc2_w"].T, p["fc2_b"].reshape(1, -1),
        p["fc3_w"].T, p["fc3_b"].reshape(1, -1))


def init_params(key, kernel_size):
    """Deterministic init with PyTorch-default U(-1/sqrt(fan_in), 1/sqrt(fan_in))."""
    K = kernel_size
    ks = jax.random.split(key, 10)

    def uni(k, shape, fan_in):
        bound = 1.0 / np.sqrt(fan_in)
        return jax.random.uniform(k, shape, jnp.float32, -bound, bound)

    return {
        "conv1_w": uni(ks[0], (32, 3, K, K), 3 * K * K),
        "conv1_b": uni(ks[1], (32,), 3 * K * K),
        "conv2_w": uni(ks[2], (64, 32, K, K), 32 * K * K),
        "conv2_b": uni(ks[3], (64,), 32 * K * K),
        "fc1_w": uni(ks[4], (128, 64), 64),
        "fc1_b": uni(ks[5], (128,), 64),
        "fc2_w": uni(ks[6], (128, 128), 128),
        "fc2_b": uni(ks[7], (128,), 128),
        "fc3_w": uni(ks[8], (3, 128), 128),
        "fc3_b": uni(ks[9], (3,), 128),
    }


def reference_forward(x, p):
    """Plain-JAX f32 reference of the PyTorch forward (for a sanity check)."""
    dn = ("NCHW", "OIHW", "NCHW")
    hp = lax.Precision.HIGHEST
    h = lax.conv_general_dilated(x, p["conv1_w"], (1, 1), "VALID",
                                 dimension_numbers=dn, precision=hp)
    h = jnp.maximum(h + p["conv1_b"][None, :, None, None], 0.0)
    h = lax.conv_general_dilated(h, p["conv2_w"], (1, 1), "VALID",
                                 dimension_numbers=dn, precision=hp)
    h = jnp.maximum(h + p["conv2_b"][None, :, None, None], 0.0)
    h = jnp.mean(h, axis=(2, 3))                                 # avg_pool2d(124)+squeeze
    h = jnp.maximum(jnp.dot(h, p["fc1_w"].T, precision=hp) + p["fc1_b"], 0.0)
    h = jnp.maximum(jnp.dot(h, p["fc2_w"].T, precision=hp) + p["fc2_b"], 0.0)
    return jnp.dot(h, p["fc3_w"].T, precision=hp) + p["fc3_b"]


if __name__ == "__main__":
    kernel_size = 3
    batch = 2
    spatial = 128   # forward hard-codes avg_pool2d(124): 128 -> 126 -> 124 -> 1x1

    key = jax.random.PRNGKey(0)
    k_x, k_p = jax.random.split(key)
    x = jax.random.normal(k_x, (batch, 3, spatial, spatial), dtype=jnp.float32)
    params = init_params(k_p, kernel_size)

    out = jax.block_until_ready(jax.jit(network_forward)(x, params))
    assert out.shape == (batch, 3), out.shape
    assert bool(jnp.all(jnp.isfinite(out)))

    ref = jax.block_until_ready(reference_forward(x, params))
    np.testing.assert_allclose(np.asarray(out), np.asarray(ref),
                               rtol=3e-2, atol=3e-2)

    print("KERNEL_OK")
</pallas_src>

<mosaic_0001>
module attributes {stable_mosaic.version = 11 : i64} {
  func.func @_network_kernel(%arg0: i32, %arg1: memref<1x128x128x3xbf16, #tpu.memory_space<vmem>>, %arg2: memref<3x9x32xbf16, #tpu.memory_space<vmem>>, %arg3: memref<1x32xf32, #tpu.memory_space<vmem>>, %arg4: memref<3x96x64xbf16, #tpu.memory_space<vmem>>, %arg5: memref<1x64xf32, #tpu.memory_space<vmem>>, %arg6: memref<64x128xf32, #tpu.memory_space<vmem>>, %arg7: memref<1x128xf32, #tpu.memory_space<vmem>>, %arg8: memref<128x128xf32, #tpu.memory_space<vmem>>, %arg9: memref<1x128xf32, #tpu.memory_space<vmem>>, %arg10: memref<128x3xf32, #tpu.memory_space<vmem>>, %arg11: memref<1x3xf32, #tpu.memory_space<vmem>>, %arg12: memref<1x1x3xf32, #tpu.memory_space<vmem>>, %arg13: memref<126x126x32xbf16, #tpu.memory_space<vmem>>) attributes {dimension_semantics = [#tpu.dimension_semantics<parallel>], iteration_bounds = array<i64: 2>, scalar_prefetch = 0 : i64, scratch_operands = 1 : i64, tpu.core_type = #tpu.core_type<tc>, window_params = [{transform_indices = @transform_0, window_bounds = array<i64: 1, 128, 128, 3>}, {pipeline_mode = #tpu.pipeline_mode<synchronous>, transform_indices = @transform_1, window_bounds = array<i64: 3, 9, 32>}, {pipeline_mode = #tpu.pipeline_mode<synchronous>, transform_indices = @transform_2, window_bounds = array<i64: 1, 32>}, {pipeline_mode = #tpu.pipeline_mode<synchronous>, transform_indices = @transform_3, window_bounds = array<i64: 3, 96, 64>}, {pipeline_mode = #tpu.pipeline_mode<synchronous>, transform_indices = @transform_4, window_bounds = array<i64: 1, 64>}, {pipeline_mode = #tpu.pipeline_mode<synchronous>, transform_indices = @transform_5, window_bounds = array<i64: 64, 128>}, {pipeline_mode = #tpu.pipeline_mode<synchronous>, transform_indices = @transform_6, window_bounds = array<i64: 1, 128>}, {pipeline_mode = #tpu.pipeline_mode<synchronous>, transform_indices = @transform_7, window_bounds = array<i64: 128, 128>}, {pipeline_mode = #tpu.pipeline_mode<synchronous>, transform_indices = @transform_8, window_bounds = array<i64: 1, 128>}, {pipeline_mode = #tpu.pipeline_mode<synchronous>, transform_indices = @transform_9, window_bounds = array<i64: 128, 3>}, {pipeline_mode = #tpu.pipeline_mode<synchronous>, transform_indices = @transform_10, window_bounds = array<i64: 1, 3>}, {transform_indices = @transform_11, window_bounds = array<i64: 1, 1, 3>}]} {
    %c0 = arith.constant 0 : index
    %c0_0 = arith.constant 0 : index
    %c0_1 = arith.constant 0 : index
    %0 = vector.load %arg2[%c0, %c0_0, %c0_1] : memref<3x9x32xbf16, #tpu.memory_space<vmem>>, vector<1x9x32xbf16>
    %1 = vector.shape_cast %0 : vector<1x9x32xbf16> to vector<9x32xbf16>
    %c1 = arith.constant 1 : index
    %c0_2 = arith.constant 0 : index
    %c0_3 = arith.constant 0 : index
    %2 = vector.load %arg2[%c1, %c0_2, %c0_3] : memref<3x9x32xbf16, #tpu.memory_space<vmem>>, vector<1x9x32xbf16>
    %3 = vector.shape_cast %2 : vector<1x9x32xbf16> to vector<9x32xbf16>
    %c2 = arith.constant 2 : index
    %c0_4 = arith.constant 0 : index
    %c0_5 = arith.constant 0 : index
    %4 = vector.load %arg2[%c2, %c0_4, %c0_5] : memref<3x9x32xbf16, #tpu.memory_space<vmem>>, vector<1x9x32xbf16>
    %5 = vector.shape_cast %4 : vector<1x9x32xbf16> to vector<9x32xbf16>
    %c0_6 = arith.constant 0 : index
    %c0_7 = arith.constant 0 : index
    %c0_8 = arith.constant 0 : index
    %6 = vector.load %arg4[%c0_6, %c0_7, %c0_8] : memref<3x96x64xbf16, #tpu.memory_space<vmem>>, vector<1x96x64xbf16>
    %7 = vector.shape_cast %6 : vector<1x96x64xbf16> to vector<96x64xbf16>
    %c1_9 = arith.constant 1 : index
    %c0_10 = arith.constant 0 : index
    %c0_11 = arith.constant 0 : index
    %8 = vector.load %arg4[%c1_9, %c0_10, %c0_11] : memref<3x96x64xbf16, #tpu.memory_space<vmem>>, vector<1x96x64xbf16>
    %9 = vector.shape_cast %8 : vector<1x96x64xbf16> to vector<96x64xbf16>
    %c2_12 = arith.constant 2 : index
    %c0_13 = arith.constant 0 : index
    %c0_14 = arith.constant 0 : index
    %10 = vector.load %arg4[%c2_12, %c0_13, %c0_14] : memref<3x96x64xbf16, #tpu.memory_space<vmem>>, vector<1x96x64xbf16>
    %11 = vector.shape_cast %10 : vector<1x96x64xbf16> to vector<96x64xbf16>
    %c0_15 = arith.constant 0 : index
    %c0_16 = arith.constant 0 : index
    %12 = vector.load %arg3[%c0_15, %c0_16] : memref<1x32xf32, #tpu.memory_space<vmem>>, vector<1x32xf32>
    %c0_17 = arith.constant 0 : index
    %c0_18 = arith.constant 0 : index
    %13 = vector.load %arg5[%c0_17, %c0_18] : memref<1x64xf32, #tpu.memory_space<vmem>>, vector<1x64xf32>
    %c0_i32 = arith.constant 0 : i32
    %c126_i32 = arith.constant 126 : i32
    %14 = arith.addi %c0_i32, %c126_i32 : i32
    %c1_i32 = arith.constant 1 : i32
    scf.for %arg14 = %c0_i32 to %14 step %c1_i32  : i32 {
      %c0_i32_45 = arith.constant 0 : i32
      %41 = arith.addi %arg14, %c0_i32_45 : i32
      %c0_46 = arith.constant 0 : index
      %42 = arith.index_cast %41 : i32 to index
      %c0_47 = arith.constant 0 : index
      %c0_48 = arith.constant 0 : index
      %43 = vector.load %arg1[%c0_46, %42, %c0_47, %c0_48] : memref<1x128x128x3xbf16, #tpu.memory_space<vmem>>, vector<1x1x128x3xbf16>
      %44 = vector.shape_cast %43 : vector<1x1x128x3xbf16> to vector<128x3xbf16>
      %c1_i32_49 = arith.constant 1 : i32
      %45 = arith.addi %arg14, %c1_i32_49 : i32
      %c0_50 = arith.constant 0 : index
      %46 = arith.index_cast %45 : i32 to index
      %c0_51 = arith.constant 0 : index
      %c0_52 = arith.constant 0 : index
      %47 = vector.load %arg1[%c0_50, %46, %c0_51, %c0_52] : memref<1x128x128x3xbf16, #tpu.memory_space<vmem>>, vector<1x1x128x3xbf16>
      %48 = vector.shape_cast %47 : vector<1x1x128x3xbf16> to vector<128x3xbf16>
      %c2_i32 = arith.constant 2 : i32
      %49 = arith.addi %arg14, %c2_i32 : i32
      %c0_53 = arith.constant 0 : index
      %50 = arith.index_cast %49 : i32 to index
      %c0_54 = arith.constant 0 : index
      %c0_55 = arith.constant 0 : index
      %51 = vector.load %arg1[%c0_53, %50, %c0_54, %c0_55] : memref<1x128x128x3xbf16, #tpu.memory_space<vmem>>, vector<1x1x128x3xbf16>
      %52 = vector.shape_cast %51 : vector<1x1x128x3xbf16> to vector<128x3xbf16>
      %53 = vector.extract_strided_slice %44 {offsets = [0, 0], sizes = [126, 3], strides = [1, 1]} : vector<128x3xbf16> to vector<126x3xbf16>
      %54 = vector.extract_strided_slice %44 {offsets = [1, 0], sizes = [126, 3], strides = [1, 1]} : vector<128x3xbf16> to vector<126x3xbf16>
      %55 = vector.extract_strided_slice %44 {offsets = [2, 0], sizes = [126, 3], strides = [1, 1]} : vector<128x3xbf16> to vector<126x3xbf16>
      %56 = tpu.concatenate %53, %54, %55 in 1 : vector<126x3xbf16>, vector<126x3xbf16>, vector<126x3xbf16> -> vector<126x9xbf16>
      %cst_56 = arith.constant dense<0.000000e+00> : vector<126x32xf32>
      %57 = tpu.matmul %56, %1, %cst_56 {dimension_numbers = #tpu.dot_dimension_numbers<[1], [0], [0], [1], [0, 0, 1, 1], [], []>} : vector<126x9xbf16>, vector<9x32xbf16>, vector<126x32xf32> -> vector<126x32xf32>
      %58 = vector.extract_strided_slice %48 {offsets = [0, 0], sizes = [126, 3], strides = [1, 1]} : vector<128x3xbf16> to vector<126x3xbf16>
      %59 = vector.extract_strided_slice %48 {offsets = [1, 0], sizes = [126, 3], strides = [1, 1]} : vector<128x3xbf16> to vector<126x3xbf16>
      %60 = vector.extract_strided_slice %48 {offsets = [2, 0], sizes = [126, 3], strides = [1, 1]} : vector<128x3xbf16> to vector<126x3xbf16>
      %61 = tpu.concatenate %58, %59, %60 in 1 : vector<126x3xbf16>, vector<126x3xbf16>, vector<126x3xbf16> -> vector<126x9xbf16>
      %cst_57 = arith.constant dense<0.000000e+00> : vector<126x32xf32>
      %62 = tpu.matmul %61, %3, %cst_57 {dimension_numbers = #tpu.dot_dimension_numbers<[1], [0], [0], [1], [0, 0, 1, 1], [], []>} : vector<126x9xbf16>, vector<9x32xbf16>, vector<126x32xf32> -> vector<126x32xf32>
      %63 = arith.addf %57, %62 : vector<126x32xf32>
      %64 = vector.extract_strided_slice %52 {offsets = [0, 0], sizes = [126, 3], strides = [1, 1]} : vector<128x3xbf16> to vector<126x3xbf16>
      %65 = vector.extract_strided_slice %52 {offsets = [1, 0], sizes = [126, 3], strides = [1, 1]} : vector<128x3xbf16> to vector<126x3xbf16>
      %66 = vector.extract_strided_slice %52 {offsets = [2, 0], sizes = [126, 3], strides = [1, 1]} : vector<128x3xbf16> to vector<126x3xbf16>
      %67 = tpu.concatenate %64, %65, %66 in 1 : vector<126x3xbf16>, vector<126x3xbf16>, vector<126x3xbf16> -> vector<126x9xbf16>
      %cst_58 = arith.constant dense<0.000000e+00> : vector<126x32xf32>
      %68 = tpu.matmul %67, %5, %cst_58 {dimension_numbers = #tpu.dot_dimension_numbers<[1], [0], [0], [1], [0, 0, 1, 1], [], []>} : vector<126x9xbf16>, vector<9x32xbf16>, vector<126x32xf32> -> vector<126x32xf32>
      %69 = arith.addf %63, %68 : vector<126x32xf32>
      %70 = vector.broadcast %12 : vector<1x32xf32> to vector<126x32xf32>
      %71 = arith.addf %69, %70 : vector<126x32xf32>
      %cst_59 = arith.constant 0.000000e+00 : f32
      %72 = vector.broadcast %cst_59 : f32 to vector<126x32xf32>
      %73 = arith.maximumf %71, %72 : vector<126x32xf32>
      %74 = arith.truncf %73 : vector<126x32xf32> to vector<126x32xbf16>
      %75 = arith.index_cast %arg14 : i32 to index
      %c0_60 = arith.constant 0 : index
      %c0_61 = arith.constant 0 : index
      %76 = vector.load %arg13[%75, %c0_60, %c0_61] : memref<126x126x32xbf16, #tpu.memory_space<vmem>>, vector<1x126x32xbf16>
      %77 = vector.shape_cast %76 : vector<1x126x32xbf16> to vector<126x32xbf16>
      %78 = vector.shape_cast %74 : vector<126x32xbf16> to vector<1x126x32xbf16>
      tpu.vector_store %arg13[%75, %c0_60, %c0_61], %78 {strides = array<i32>} : memref<126x126x32xbf16, #tpu.memory_space<vmem>>, vector<1x126x32xbf16>,
    }
    %c126_i32_19 = arith.constant 126 : i32
    %cst = arith.constant 0.000000e+00 : f32
    %15 = vector.broadcast %cst : f32 to vector<124x64xf32>
    %c0_i32_20 = arith.constant 0 : i32
    %c124_i32 = arith.constant 124 : i32
    %16 = arith.addi %c0_i32_20, %c124_i32 : i32
    %c1_i32_21 = arith.constant 1 : i32
    %17 = scf.for %arg14 = %c0_i32_20 to %16 step %c1_i32_21 iter_args(%arg15 = %15) -> (vector<124x64xf32>)  : i32 {
      %c0_i32_45 = arith.constant 0 : i32
      %41 = arith.addi %arg14, %c0_i32_45 : i32
      %42 = arith.index_cast %41 : i32 to index
      %c0_46 = arith.constant 0 : index
      %c0_47 = arith.constant 0 : index
      %43 = vector.load %arg13[%42, %c0_46, %c0_47] : memref<126x126x32xbf16, #tpu.memory_space<vmem>>, vector<1x126x32xbf16>
      %44 = vector.shape_cast %43 : vector<1x126x32xbf16> to vector<126x32xbf16>
      %c1_i32_48 = arith.constant 1 : i32
      %45 = arith.addi %arg14, %c1_i32_48 : i32
      %46 = arith.index_cast %45 : i32 to index
      %c0_49 = arith.constant 0 : index
      %c0_50 = arith.constant 0 : index
      %47 = vector.load %arg13[%46, %c0_49, %c0_50] : memref<126x126x32xbf16, #tpu.memory_space<vmem>>, vector<1x126x32xbf16>
      %48 = vector.shape_cast %47 : vector<1x126x32xbf16> to vector<126x32xbf16>
      %c2_i32 = arith.constant 2 : i32
      %49 = arith.addi %arg14, %c2_i32 : i32
      %50 = arith.index_cast %49 : i32 to index
      %c0_51 = arith.constant 0 : index
      %c0_52 = arith.constant 0 : index
      %51 = vector.load %arg13[%50, %c0_51, %c0_52] : memref<126x126x32xbf16, #tpu.memory_space<vmem>>, vector<1x126x32xbf16>
      %52 = vector.shape_cast %51 : vector<1x126x32xbf16> to vector<126x32xbf16>
      %53 = vector.extract_strided_slice %44 {offsets = [0, 0], sizes = [124, 32], strides = [1, 1]} : vector<126x32xbf16> to vector<124x32xbf16>
      %54 = vector.extract_strided_slice %44 {offsets = [1, 0], sizes = [124, 32], strides = [1, 1]} : vector<126x32xbf16> to vector<124x32xbf16>
      %55 = vector.extract_strided_slice %44 {offsets = [2, 0], sizes = [124, 32], strides = [1, 1]} : vector<126x32xbf16> to vector<124x32xbf16>
      %56 = tpu.concatenate %53, %54, %55 in 1 : vector<124x32xbf16>, vector<124x32xbf16>, vector<124x32xbf16> -> vector<124x96xbf16>
      %cst_53 = arith.constant dense<0.000000e+00> : vector<124x64xf32>
      %57 = tpu.matmul %56, %7, %cst_53 {dimension_numbers = #tpu.dot_dimension_numbers<[1], [0], [0], [1], [0, 0, 1, 1], [], []>} : vector<124x96xbf16>, vector<96x64xbf16>, vector<124x64xf32> -> vector<124x64xf32>
      %58 = vector.extract_strided_slice %48 {offsets = [0, 0], sizes = [124, 32], strides = [1, 1]} : vector<126x32xbf16> to vector<124x32xbf16>
      %59 = vector.extract_strided_slice %48 {offsets = [1, 0], sizes = [124, 32], strides = [1, 1]} : vector<126x32xbf16> to vector<124x32xbf16>
      %60 = vector.extract_strided_slice %48 {offsets = [2, 0], sizes = [124, 32], strides = [1, 1]} : vector<126x32xbf16> to vector<124x32xbf16>
      %61 = tpu.concatenate %58, %59, %60 in 1 : vector<124x32xbf16>, vector<124x32xbf16>, vector<124x32xbf16> -> vector<124x96xbf16>
      %cst_54 = arith.constant dense<0.000000e+00> : vector<124x64xf32>
      %62 = tpu.matmul %61, %9, %cst_54 {dimension_numbers = #tpu.dot_dimension_numbers<[1], [0], [0], [1], [0, 0, 1, 1], [], []>} : vector<124x96xbf16>, vector<96x64xbf16>, vector<124x64xf32> -> vector<124x64xf32>
      %63 = arith.addf %57, %62 : vector<124x64xf32>
      %64 = vector.extract_strided_slice %52 {offsets = [0, 0], sizes = [124, 32], strides = [1, 1]} : vector<126x32xbf16> to vector<124x32xbf16>
      %65 = vector.extract_strided_slice %52 {offsets = [1, 0], sizes = [124, 32], strides = [1, 1]} : vector<126x32xbf16> to vector<124x32xbf16>
      %66 = vector.extract_strided_slice %52 {offsets = [2, 0], sizes = [124, 32], strides = [1, 1]} : vector<126x32xbf16> to vector<124x32xbf16>
      %67 = tpu.concatenate %64, %65, %66 in 1 : vector<124x32xbf16>, vector<124x32xbf16>, vector<124x32xbf16> -> vector<124x96xbf16>
      %cst_55 = arith.constant dense<0.000000e+00> : vector<124x64xf32>
      %68 = tpu.matmul %67, %11, %cst_55 {dimension_numbers = #tpu.dot_dimension_numbers<[1], [0], [0], [1], [0, 0, 1, 1], [], []>} : vector<124x96xbf16>, vector<96x64xbf16>, vector<124x64xf32> -> vector<124x64xf32>
      %69 = arith.addf %63, %68 : vector<124x64xf32>
      %70 = vector.broadcast %13 : vector<1x64xf32> to vector<124x64xf32>
      %71 = arith.addf %69, %70 : vector<124x64xf32>
      %cst_56 = arith.constant 0.000000e+00 : f32
      %72 = vector.broadcast %cst_56 : f32 to vector<124x64xf32>
      %73 = arith.maximumf %71, %72 : vector<124x64xf32>
      %74 = arith.addf %arg15, %73 : vector<124x64xf32>
      scf.yield %74 : vector<124x64xf32>
    }
    %c124_i32_22 = arith.constant 124 : i32
    %cst_23 = arith.constant dense<0.000000e+00> : vector<64xf32>
    %18 = vector.multi_reduction <add>, %17, %cst_23 [0] : vector<124x64xf32> to vector<64xf32>
    %19 = vector.shape_cast %18 : vector<64xf32> to vector<1x64xf32>
    %cst_24 = arith.constant 6.50364236E-5 : f32
    %20 = vector.broadcast %cst_24 : f32 to vector<1x64xf32>
    %21 = arith.mulf %19, %20 : vector<1x64xf32>
    %c0_25 = arith.constant 0 : index
    %c0_26 = arith.constant 0 : index
    %22 = vector.load %arg6[%c0_25, %c0_26] : memref<64x128xf32, #tpu.memory_space<vmem>>, vector<64x128xf32>
    %cst_27 = arith.constant dense<0.000000e+00> : vector<1x128xf32>
    %23 = tpu.matmul %21, %22, %cst_27 {dimension_numbers = #tpu.dot_dimension_numbers<[1], [0], [0], [1], [0, 0, 1, 1], [], []>} : vector<1x64xf32>, vector<64x128xf32>, vector<1x128xf32> -> vector<1x128xf32>
    %c0_28 = arith.constant 0 : index
    %c0_29 = arith.constant 0 : index
    %24 = vector.load %arg7[%c0_28, %c0_29] : memref<1x128xf32, #tpu.memory_space<vmem>>, vector<1x128xf32>
    %25 = arith.addf %23, %24 : vector<1x128xf32>
    %cst_30 = arith.constant 0.000000e+00 : f32
    %26 = vector.broadcast %cst_30 : f32 to vector<1x128xf32>
    %27 = arith.maximumf %25, %26 : vector<1x128xf32>
    %c0_31 = arith.constant 0 : index
    %c0_32 = arith.constant 0 : index
    %28 = vector.load %arg8[%c0_31, %c0_32] : memref<128x128xf32, #tpu.memory_space<vmem>>, vector<128x128xf32>
    %cst_33 = arith.constant dense<0.000000e+00> : vector<1x128xf32>
    %29 = tpu.matmul %27, %28, %cst_33 {dimension_numbers = #tpu.dot_dimension_numbers<[1], [0], [0], [1], [0, 0, 1, 1], [], []>} : vector<1x128xf32>, vector<128x128xf32>, vector<1x128xf32> -> vector<1x128xf32>
    %c0_34 = arith.constant 0 : index
    %c0_35 = arith.constant 0 : index
    %30 = vector.load %arg9[%c0_34, %c0_35] : memref<1x128xf32, #tpu.memory_space<vmem>>, vector<1x128xf32>
    %31 = arith.addf %29, %30 : vector<1x128xf32>
    %cst_36 = arith.constant 0.000000e+00 : f32
    %32 = vector.broadcast %cst_36 : f32 to vector<1x128xf32>
    %33 = arith.maximumf %31, %32 : vector<1x128xf32>
    %c0_37 = arith.constant 0 : index
    %c0_38 = arith.constant 0 : index
    %34 = vector.load %arg10[%c0_37, %c0_38] : memref<128x3xf32, #tpu.memory_space<vmem>>, vector<128x3xf32>
    %cst_39 = arith.constant dense<0.000000e+00> : vector<1x3xf32>
    %35 = tpu.matmul %33, %34, %cst_39 {dimension_numbers = #tpu.dot_dimension_numbers<[1], [0], [0], [1], [0, 0, 1, 1], [], []>} : vector<1x128xf32>, vector<128x3xf32>, vector<1x3xf32> -> vector<1x3xf32>
    %c0_40 = arith.constant 0 : index
    %c0_41 = arith.constant 0 : index
    %36 = vector.load %arg11[%c0_40, %c0_41] : memref<1x3xf32, #tpu.memory_space<vmem>>, vector<1x3xf32>
    %37 = arith.addf %35, %36 : vector<1x3xf32>
    %c0_42 = arith.constant 0 : index
    %c0_43 = arith.constant 0 : index
    %c0_44 = arith.constant 0 : index
    %38 = vector.load %arg12[%c0_42, %c0_43, %c0_44] : memref<1x1x3xf32, #tpu.memory_space<vmem>>, vector<1x1x3xf32>
    %39 = vector.shape_cast %38 : vector<1x1x3xf32> to vector<1x3xf32>
    %40 = vector.shape_cast %37 : vector<1x3xf32> to vector<1x1x3xf32>
    tpu.vector_store %arg12[%c0_42, %c0_43, %c0_44], %40 {strides = array<i32>} : memref<1x1x3xf32, #tpu.memory_space<vmem>>, vector<1x1x3xf32>,
    return
  }
  func.func @transform_0(%arg0: i32) -> (i32, i32, i32, i32) {
    %c0_i32 = arith.constant 0 : i32
    %c0_i32_0 = arith.constant 0 : i32
    %c0_i32_1 = arith.constant 0 : i32
    %c0_i32_2 = arith.constant 0 : i32
    return %arg0, %c0_i32, %c0_i32_0, %c0_i32_1 : i32, i32, i32, i32
  }
  func.func @transform_1(%arg0: i32) -> (i32, i32, i32) {
    %c0_i32 = arith.constant 0 : i32
    %c0_i32_0 = arith.constant 0 : i32
    %c0_i32_1 = arith.constant 0 : i32
    %c0_i32_2 = arith.constant 0 : i32
    return %c0_i32, %c0_i32_0, %c0_i32_1 : i32, i32, i32
  }
  func.func @transform_2(%arg0: i32) -> (i32, i32) {
    %c0_i32 = arith.constant 0 : i32
    %c0_i32_0 = arith.constant 0 : i32
    %c0_i32_1 = arith.constant 0 : i32
    return %c0_i32, %c0_i32_0 : i32, i32
  }
  func.func @transform_3(%arg0: i32) -> (i32, i32, i32) {
    %c0_i32 = arith.constant 0 : i32
    %c0_i32_0 = arith.constant 0 : i32
    %c0_i32_1 = arith.constant 0 : i32
    %c0_i32_2 = arith.constant 0 : i32
    return %c0_i32, %c0_i32_0, %c0_i32_1 : i32, i32, i32
  }
  func.func @transform_4(%arg0: i32) -> (i32, i32) {
    %c0_i32 = arith.constant 0 : i32
    %c0_i32_0 = arith.constant 0 : i32
    %c0_i32_1 = arith.constant 0 : i32
    return %c0_i32, %c0_i32_0 : i32, i32
  }
  func.func @transform_5(%arg0: i32) -> (i32, i32) {
    %c0_i32 = arith.constant 0 : i32
    %c0_i32_0 = arith.constant 0 : i32
    %c0_i32_1 = arith.constant 0 : i32
    return %c0_i32, %c0_i32_0 : i32, i32
  }
  func.func @transform_6(%arg0: i32) -> (i32, i32) {
    %c0_i32 = arith.constant 0 : i32
    %c0_i32_0 = arith.constant 0 : i32
    %c0_i32_1 = arith.constant 0 : i32
    return %c0_i32, %c0_i32_0 : i32, i32
  }
  func.func @transform_7(%arg0: i32) -> (i32, i32) {
    %c0_i32 = arith.constant 0 : i32
    %c0_i32_0 = arith.constant 0 : i32
    %c0_i32_1 = arith.constant 0 : i32
    return %c0_i32, %c0_i32_0 : i32, i32
  }
  func.func @transform_8(%arg0: i32) -> (i32, i32) {
    %c0_i32 = arith.constant 0 : i32
    %c0_i32_0 = arith.constant 0 : i32
    %c0_i32_1 = arith.constant 0 : i32
    return %c0_i32, %c0_i32_0 : i32, i32
  }
  func.func @transform_9(%arg0: i32) -> (i32, i32) {
    %c0_i32 = arith.constant 0 : i32
    %c0_i32_0 = arith.constant 0 : i32
    %c0_i32_1 = arith.constant 0 : i32
    return %c0_i32, %c0_i32_0 : i32, i32
  }
  func.func @transform_10(%arg0: i32) -> (i32, i32) {
    %c0_i32 = arith.constant 0 : i32
    %c0_i32_0 = arith.constant 0 : i32
    %c0_i32_1 = arith.constant 0 : i32
    return %c0_i32, %c0_i32_0 : i32, i32
  }
  func.func @transform_11(%arg0: i32) -> (i32, i32, i32) {
    %c0_i32 = arith.constant 0 : i32
    %c0_i32_0 = arith.constant 0 : i32
    %c0_i32_1 = arith.constant 0 : i32
    return %arg0, %c0_i32, %c0_i32_0 : i32, i32, i32
  }
}

</mosaic_0001>

<llo_original>
// kernel: network_forward.1
$region0: #{network_forward.1}
  #allocation0 [shape = 'u32[]', space=smem, size = 0x4, offset = 0x4, fixed_abs, tag = 'smem constant byte address 0x4 - core index']
  #allocation1 [shape = 'u32[144,128]{1,0:T(1,128)}', space=vmem, size = 0x12000, scoped, tag = 'internal scratch']
  #allocation2 [shape = 'bf16[126,126,32]{2,1,0:T(8,128)(2,1)}', space=vmem, size = 0x3f0000, scoped, tag = 'scratch operand']
  %s0 = inlined_call_operand.vmem [shape: bf16[2,128,128,3], index: 0, kind: input, shape index: {}]
  %s1 = inlined_call_operand.vmem [shape: bf16[3,9,32], index: 1, kind: input, shape index: {}]
  %s2 = inlined_call_operand.vmem [shape: f32[1,32], index: 2, kind: input, shape index: {}]
  %s3 = inlined_call_operand.vmem [shape: bf16[3,96,64], index: 3, kind: input, shape index: {}]
  %s4 = inlined_call_operand.vmem [shape: f32[1,64], index: 4, kind: input, shape index: {}]
  %s5 = inlined_call_operand.vmem [shape: f32[64,128], index: 5, kind: input, shape index: {}]
  %s6 = inlined_call_operand.vmem [shape: f32[1,128], index: 6, kind: input, shape index: {}]
  %s7 = inlined_call_operand.vmem [shape: f32[128,128], index: 7, kind: input, shape index: {}]
  %s8 = inlined_call_operand.vmem [shape: f32[1,128], index: 8, kind: input, shape index: {}]
  %s9 = inlined_call_operand.vmem [shape: f32[128,3], index: 9, kind: input, shape index: {}]
  %s10 = inlined_call_operand.vmem [shape: f32[1,3], index: 10, kind: input, shape index: {}]
  %s11 = inlined_call_operand.hbm [shape: f32[2,1,3], index: 11, kind: output, shape index: {}]
  %s12 = sld [smem:[#allocation0]]
  $region91: #{network_forward.1} parent=0
    _
  %s14 = ssub.s32 1, %s12
  %s15 = scalar_select 0, %s14, %s12
  $region1: #{network_forward.1} parent=0
    #allocation3 [shape = 'u8[1024]{0}', space=vmem, size = 0x400, scoped, tag = 'output window, operand 0']
    #allocation4 [shape = 's32[2]{0}', space=sflag, size = 0x8, scoped, tag = 'scoped memory for network_forward.1']
    %16 = vsyncpa [#allocation4], 0
    %s17 = scalar_lea.sflag [#allocation4], 1
    %18 = vsyncpa %s17, 0
    loop: start=0, step=1, limit=4
    $region2: #{network_forward.1} parent=1 // loop_pre_header
      _
    $region3: #{network_forward.1} parent=1 // loop_header
      %s20 = sphi 0, %s24
      %p21 = scmp.ge.s32.totalorder %s20, 4
      %s30 = sphi 0, %s32
      %s33 = sphi 0, %s30
      %s34 = sphi 0, %s33
      %s50 = sphi 0, %s34
      %s54 = sphi 0, %s54
      %s56 = sphi 0, %s54
      %s57 = sphi 0, %s56
      %s71 = sphi 0, %s57
      %s75 = sphi 0, %s75
      %s77 = sphi 0, %s75
      %s78 = sphi 0, %s77
      %s92 = sphi 0, %s78
      %s96 = sphi 0, %s96
      %s98 = sphi 0, %s96
      %s99 = sphi 0, %s98
      %s113 = sphi 0, %s99
      %s117 = sphi 0, %s117
      %s119 = sphi 0, %s117
      %s120 = sphi 0, %s119
      %s134 = sphi 0, %s120
      %s138 = sphi 0, %s138
      %s140 = sphi 0, %s138
      %s141 = sphi 0, %s140
      %s155 = sphi 0, %s141
      %s159 = sphi 0, %s159
      %s161 = sphi 0, %s159
      %s162 = sphi 0, %s161
      %s176 = sphi 0, %s162
      %s180 = sphi 0, %s180
      %s182 = sphi 0, %s180
      %s183 = sphi 0, %s182
      %s197 = sphi 0, %s183
      %s201 = sphi 0, %s201
      %s203 = sphi 0, %s201
      %s204 = sphi 0, %s203
      %s218 = sphi 0, %s204
      %s222 = sphi 0, %s222
      %s224 = sphi 0, %s222
      %s225 = sphi 0, %s224
      %s239 = sphi 0, %s225
      %s243 = sphi 0, %s243
      %s245 = sphi 0, %s243
      %s246 = sphi 0, %s245
      %s260 = sphi 0, %s246
      %s266 = sphi 0, %s268
      %s269 = sphi 0, %s266
      %s270 = sphi 0, %s269
      %s286 = sphi 0, %s270
    $region4: #{network_forward.1} parent=1 // loop_header_branch
      %23 = sbr.rel (%p21) target = $region8
    $region5: #{network_forward.1} parent=1 // loop_body
      %s25 = ssub.s32 %s20, 1
      %s26 = ssub.s32 %s20, 2
      %s27 = sadd.s32 %s20, 1
      %s28 = ssub.s32 %s20, %s27
      %p29 = scmp.eq.s32.totalorder %s28, 0
      %s31 = sadd.s32 %s30, 1
      %s32 = scalar_select %p29, %s30, %s31
      %p35 = pneg %p29
      %p36 = scmp.eq.s32.totalorder %s20, 1
      %p37 = por %p35, %p36
      %p38 = scmp.ne.s32.totalorder %s30, %s33
      %p39 = scmp.eq.s32.totalorder %s20, 0
      %p40 = por %p38, %p39
      %p41 = scmp.ne.s32.totalorder %s30, %s33
      %p42 = scmp.eq.s32.totalorder %s25, 1
      %p43 = por %p41, %p42
      %p44 = scmp.ne.s32.totalorder %s33, %s34
      %p45 = scmp.eq.s32.totalorder %s25, 0
      %p46 = por %p44, %p45
      %p47 = scmp.ne.s32.totalorder %s33, %s34
      %p48 = scmp.eq.s32.totalorder %s26, 1
      %p49 = por %p47, %p48
      %p51 = scmp.ne.s32.totalorder %s34, %s50
      %p52 = scmp.eq.s32.totalorder %s26, 0
      %p53 = por %p51, %p52
      %s55 = sadd.s32 %s54, 1
      %p58 = scmp.eq.s32.totalorder %s20, 1
      %p59 = scmp.ne.s32.totalorder %s54, %s56
      %p60 = scmp.eq.s32.totalorder %s20, 0
      %p61 = por %p59, %p60
      %p62 = scmp.ne.s32.totalorder %s54, %s56
      %p63 = scmp.eq.s32.totalorder %s25, 1
      %p64 = por %p62, %p63
      %p65 = scmp.ne.s32.totalorder %s56, %s57
      %p66 = scmp.eq.s32.totalorder %s25, 0
      %p67 = por %p65, %p66
      %p68 = scmp.ne.s32.totalorder %s56, %s57
      %p69 = scmp.eq.s32.totalorder %s26, 1
      %p70 = por %p68, %p69
      %p72 = scmp.ne.s32.totalorder %s57, %s71
      %p73 = scmp.eq.s32.totalorder %s26, 0
      %p74 = por %p72, %p73
      %s76 = sadd.s32 %s75, 1
      %p79 = scmp.eq.s32.totalorder %s20, 1
      %p80 = scmp.ne.s32.totalorder %s75, %s77
      %p81 = scmp.eq.s32.totalorder %s20, 0
      %p82 = por %p80, %p81
      %p83 = scmp.ne.s32.totalorder %s75, %s77
      %p84 = scmp.eq.s32.totalorder %s25, 1
      %p85 = por %p83, %p84
      %p86 = scmp.ne.s32.totalorder %s77, %s78
      %p87 = scmp.eq.s32.totalorder %s25, 0
      %p88 = por %p86, %p87
      %p89 = scmp.ne.s32.totalorder %s77, %s78
      %p90 = scmp.eq.s32.totalorder %s26, 1
      %p91 = por %p89, %p90
      %p93 = scmp.ne.s32.totalorder %s78, %s92
      %p94 = scmp.eq.s32.totalorder %s26, 0
      %p95 = por %p93, %p94
      %s97 = sadd.s32 %s96, 1
      %p100 = scmp.eq.s32.totalorder %s20, 1
      %p101 = scmp.ne.s32.totalorder %s96, %s98
      %p102 = scmp.eq.s32.totalorder %s20, 0
      %p103 = por %p101, %p102
      %p104 = scmp.ne.s32.totalorder %s96, %s98
      %p105 = scmp.eq.s32.totalorder %s25, 1
      %p106 = por %p104, %p105
      %p107 = scmp.ne.s32.totalorder %s98, %s99
      %p108 = scmp.eq.s32.totalorder %s25, 0
      %p109 = por %p107, %p108
      %p110 = scmp.ne.s32.totalorder %s98, %s99
      %p111 = scmp.eq.s32.totalorder %s26, 1
      %p112 = por %p110, %p111
      %p114 = scmp.ne.s32.totalorder %s99, %s113
      %p115 = scmp.eq.s32.totalorder %s26, 0
      %p116 = por %p114, %p115
      %s118 = sadd.s32 %s117, 1
      %p121 = scmp.eq.s32.totalorder %s20, 1
      %p122 = scmp.ne.s32.totalorder %s117, %s119
      %p123 = scmp.eq.s32.totalorder %s20, 0
      %p124 = por %p122, %p123
      %p125 = scmp.ne.s32.totalorder %s117, %s119
      %p126 = scmp.eq.s32.totalorder %s25, 1
      %p127 = por %p125, %p126
      %p128 = scmp.ne.s32.totalorder %s119, %s120
      %p129 = scmp.eq.s32.totalorder %s25, 0
      %p130 = por %p128, %p129
      %p131 = scmp.ne.s32.totalorder %s119, %s120
      %p132 = scmp.eq.s32.totalorder %s26, 1
      %p133 = por %p131, %p132
      %p135 = scmp.ne.s32.totalorder %s120, %s134
      %p136 = scmp.eq.s32.totalorder %s26, 0
      %p137 = por %p135, %p136
      %s139 = sadd.s32 %s138, 1
      %p142 = scmp.eq.s32.totalorder %s20, 1
      %p143 = scmp.ne.s32.totalorder %s138, %s140
      %p144 = scmp.eq.s32.totalorder %s20, 0
      %p145 = por %p143, %p144
      %p146 = scmp.ne.s32.totalorder %s138, %s140
      %p147 = scmp.eq.s32.totalorder %s25, 1
      %p148 = por %p146, %p147
      %p149 = scmp.ne.s32.totalorder %s140, %s141
      %p150 = scmp.eq.s32.totalorder %s25, 0
      %p151 = por %p149, %p150
      %p152 = scmp.ne.s32.totalorder %s140, %s141
      %p153 = scmp.eq.s32.totalorder %s26, 1
      %p154 = por %p152, %p153
      %p156 = scmp.ne.s32.totalorder %s141, %s155
      %p157 = scmp.eq.s32.totalorder %s26, 0
      %p158 = por %p156, %p157
      %s160 = sadd.s32 %s159, 1
      %p163 = scmp.eq.s32.totalorder %s20, 1
      %p164 = scmp.ne.s32.totalorder %s159, %s161
      %p165 = scmp.eq.s32.totalorder %s20, 0
      %p166 = por %p164, %p165
      %p167 = scmp.ne.s32.totalorder %s159, %s161
      %p168 = scmp.eq.s32.totalorder %s25, 1
      %p169 = por %p167, %p168
      %p170 = scmp.ne.s32.totalorder %s161, %s162
      %p171 = scmp.eq.s32.totalorder %s25, 0
      %p172 = por %p170, %p171
      %p173 = scmp.ne.s32.totalorder %s161, %s162
      %p174 = scmp.eq.s32.totalorder %s26, 1
      %p175 = por %p173, %p174
      %p177 = scmp.ne.s32.totalorder %s162, %s176
      %p178 = scmp.eq.s32.totalorder %s26, 0
      %p179 = por %p177, %p178
      %s181 = sadd.s32 %s180, 1
      %p184 = scmp.eq.s32.totalorder %s20, 1
      %p185 = scmp.ne.s32.totalorder %s180, %s182
      %p186 = scmp.eq.s32.totalorder %s20, 0
      %p187 = por %p185, %p186
      %p188 = scmp.ne.s32.totalorder %s180, %s182
      %p189 = scmp.eq.s32.totalorder %s25, 1
      %p190 = por %p188, %p189
      %p191 = scmp.ne.s32.totalorder %s182, %s183
      %p192 = scmp.eq.s32.totalorder %s25, 0
      %p193 = por %p191, %p192
      %p194 = scmp.ne.s32.totalorder %s182, %s183
      %p195 = scmp.eq.s32.totalorder %s26, 1
      %p196 = por %p194, %p195
      %p198 = scmp.ne.s32.totalorder %s183, %s197
      %p199 = scmp.eq.s32.totalorder %s26, 0
      %p200 = por %p198, %p199
      %s202 = sadd.s32 %s201, 1
      %p205 = scmp.eq.s32.totalorder %s20, 1
      %p206 = scmp.ne.s32.totalorder %s201, %s203
      %p207 = scmp.eq.s32.totalorder %s20, 0
      %p208 = por %p206, %p207
      %p209 = scmp.ne.s32.totalorder %s201, %s203
      %p210 = scmp.eq.s32.totalorder %s25, 1
      %p211 = por %p209, %p210
      %p212 = scmp.ne.s32.totalorder %s203, %s204
      %p213 = scmp.eq.s32.totalorder %s25, 0
      %p214 = por %p212, %p213
      %p215 = scmp.ne.s32.totalorder %s203, %s204
      %p216 = scmp.eq.s32.totalorder %s26, 1
      %p217 = por %p215, %p216
      %p219 = scmp.ne.s32.totalorder %s204, %s218
      %p220 = scmp.eq.s32.totalorder %s26, 0
      %p221 = por %p219, %p220
      %s223 = sadd.s32 %s222, 1
      %p226 = scmp.eq.s32.totalorder %s20, 1
      %p227 = scmp.ne.s32.totalorder %s222, %s224
      %p228 = scmp.eq.s32.totalorder %s20, 0
      %p229 = por %p227, %p228
      %p230 = scmp.ne.s32.totalorder %s222, %s224
      %p231 = scmp.eq.s32.totalorder %s25, 1
      %p232 = por %p230, %p231
      %p233 = scmp.ne.s32.totalorder %s224, %s225
      %p234 = scmp.eq.s32.totalorder %s25, 0
      %p235 = por %p233, %p234
      %p236 = scmp.ne.s32.totalorder %s224, %s225
      %p237 = scmp.eq.s32.totalorder %s26, 1
      %p238 = por %p236, %p237
      %p240 = scmp.ne.s32.totalorder %s225, %s239
      %p241 = scmp.eq.s32.totalorder %s26, 0
      %p242 = por %p240, %p241
      %s244 = sadd.s32 %s243, 1
      %p247 = scmp.eq.s32.totalorder %s20, 1
      %p248 = scmp.ne.s32.totalorder %s243, %s245
      %p249 = scmp.eq.s32.totalorder %s20, 0
      %p250 = por %p248, %p249
      %p251 = scmp.ne.s32.totalorder %s243, %s245
      %p252 = scmp.eq.s32.totalorder %s25, 1
      %p253 = por %p251, %p252
      %p254 = scmp.ne.s32.totalorder %s245, %s246
      %p255 = scmp.eq.s32.totalorder %s25, 0
      %p256 = por %p254, %p255
      %p257 = scmp.ne.s32.totalorder %s245, %s246
      %p258 = scmp.eq.s32.totalorder %s26, 1
      %p259 = por %p257, %p258
      %p261 = scmp.ne.s32.totalorder %s246, %s260
      %p262 = scmp.eq.s32.totalorder %s26, 0
      %p263 = por %p261, %p262
      %s264 = ssub.s32 %s20, %s27
      %p265 = scmp.eq.s32.totalorder %s264, 0
      %s267 = sadd.s32 %s266, 1
      %s268 = scalar_select %p265, %s266, %s267
      %p271 = pneg %p265
      %p272 = scmp.eq.s32.totalorder %s20, 1
      %p273 = por %p271, %p272
      %p274 = scmp.ne.s32.totalorder %s266, %s269
      %p275 = scmp.eq.s32.totalorder %s20, 0
      %p276 = por %p274, %p275
      %p277 = scmp.ne.s32.totalorder %s266, %s269
      %p278 = scmp.eq.s32.totalorder %s25, 1
      %p279 = por %p277, %p278
      %p280 = scmp.ne.s32.totalorder %s269, %s270
      %p281 = scmp.eq.s32.totalorder %s25, 0
      %p282 = por %p280, %p281
      %p283 = scmp.ne.s32.totalorder %s269, %s270
      %p284 = scmp.eq.s32.totalorder %s26, 1
      %p285 = por %p283, %p284
      %p287 = scmp.ne.s32.totalorder %s270, %s286
      %p288 = scmp.eq.s32.totalorder %s26, 0
      %p289 = por %p287, %p288
      %p290 = scmp.le.s32.totalorder 1, %s20
      %p291 = scmp.lt.s32.totalorder %s20, 3
      %p292 = pnand %p290, %p291
      %p293 = pneg %p292
      // Predicated region
      $region9: #{network_forward.1} parent=5 // pred_check
        _
      $region10: #{network_forward.1} parent=5 // pred_check_branch
        %295 = sbr.rel (%p292) target = $region12
      $region11: #{network_forward.1} parent=5 // pred_region
        %s296 = ssub.s32 %s20, 1
        // Predicated region
        $region13: #{network_forward.1} parent=11 // pred_check
          %p297 = pneg %p67
        $region14: #{network_forward.1} parent=11 // pred_check_branch
          %299 = sbr.rel (%p297) target = $region16
        $region15: #{network_forward.1} parent=11 // pred_region
          _
        $region16: #{network_forward.1} parent=11 // pred_fallthru
          _
        // Predicated region
        $region17: #{network_forward.1} parent=11 // pred_check
          %p300 = pneg %p88
        $region18: #{network_forward.1} parent=11 // pred_check_branch
          %302 = sbr.rel (%p300) target = $region20
        $region19: #{network_forward.1} parent=11 // pred_region
          _
        $region20: #{network_forward.1} parent=11 // pred_fallthru
          _
        // Predicated region
        $region21: #{network_forward.1} parent=11 // pred_check
          %p303 = pneg %p109
        $region22: #{network_forward.1} parent=11 // pred_check_branch
          %305 = sbr.rel (%p303) target = $region24
        $region23: #{network_forward.1} parent=11 // pred_region
          _
        $region24: #{network_forward.1} parent=11 // pred_fallthru
          _
        // Predicated region
        $region25: #{network_forward.1} parent=11 // pred_check
          %p306 = pneg %p130
        $region26: #{network_forward.1} parent=11 // pred_check_branch
          %308 = sbr.rel (%p306) target = $region28
        $region27: #{network_forward.1} parent=11 // pred_region
          _
        $region28: #{network_forward.1} parent=11 // pred_fallthru
          _
        // Predicated region
        $region29: #{network_forward.1} parent=11 // pred_check
          %p309 = pneg %p151
        $region30: #{network_forward.1} parent=11 // pred_check_branch
          %311 = sbr.rel (%p309) target = $region32
        $region31: #{network_forward.1} parent=11 // pred_region
          _
        $region32: #{network_forward.1} parent=11 // pred_fallthru
          _
        // Predicated region
        $region33: #{network_forward.1} parent=11 // pred_check
          %p312 = pneg %p172
        $region34: #{network_forward.1} parent=11 // pred_check_branch
          %314 = sbr.rel (%p312) target = $region36
        $region35: #{network_forward.1} parent=11 // pred_region
          _
        $region36: #{network_forward.1} parent=11 // pred_fallthru
          _
        // Predicated region
        $region37: #{network_forward.1} parent=11 // pred_check
          %p315 = pneg %p193
        $region38: #{network_forward.1} parent=11 // pred_check_branch
          %317 = sbr.rel (%p315) target = $region40
        $region39: #{network_forward.1} parent=11 // pred_region
          _
        $region40: #{network_forward.1} parent=11 // pred_fallthru
          _
        // Predicated region
        $region41: #{network_forward.1} parent=11 // pred_check
          %p318 = pneg %p214
        $region42: #{network_forward.1} parent=11 // pred_check_branch
          %320 = sbr.rel (%p318) target = $region44
        $region43: #{network_forward.1} parent=11 // pred_region
          _
        $region44: #{network_forward.1} parent=11 // pred_fallthru
          _
        // Predicated region
        $region45: #{network_forward.1} parent=11 // pred_check
          %p321 = pneg %p235
        $region46: #{network_forward.1} parent=11 // pred_check_branch
          %323 = sbr.rel (%p321) target = $region48
        $region47: #{network_forward.1} parent=11 // pred_region
          _
        $region48: #{network_forward.1} parent=11 // pred_fallthru
          _
        // Predicated region
        $region49: #{network_forward.1} parent=11 // pred_check
          %p324 = pneg %p256
        $region50: #{network_forward.1} parent=11 // pred_check_branch
          %326 = sbr.rel (%p324) target = $region52
        $region51: #{network_forward.1} parent=11 // pred_region
          _
        $region52: #{network_forward.1} parent=11 // pred_fallthru
          _
      $region12: #{network_forward.1} parent=5 // pred_fallthru
        _
      %p327 = scmp.lt.s32.totalorder %s20, 2
      // Predicated region
      $region53: #{network_forward.1} parent=5 // pred_check
        %p328 = pneg %p327
      $region54: #{network_forward.1} parent=5 // pred_check_branch
        %330 = sbr.rel (%p328) target = $region56
      $region55: #{network_forward.1} parent=5 // pred_region
        // Predicated region
        $region57: #{network_forward.1} parent=55 // pred_check
          %p331 = pneg %p40
        $region58: #{network_forward.1} parent=55 // pred_check_branch
          %333 = sbr.rel (%p331) target = $region60
        $region59: #{network_forward.1} parent=55 // pred_region
          %p334 = scmp.lt.s32.totalorder %s20, 1
          %s335 = scalar_select %p334, %s20, 1
          %s336 = smul.addr %s335, 2048
          %s337 = smul.addr %s336, 4
          %s338 = scalar_lea.vmem %s0, %s337
        $region60: #{network_forward.1} parent=55 // pred_fallthru
          _
      $region56: #{network_forward.1} parent=5 // pred_fallthru
        _
      %p339 = scmp.le.s32.totalorder 1, %s20
      %p340 = scmp.lt.s32.totalorder %s20, 3
      %p341 = pnand %p339, %p340
      %p342 = pneg %p341
      // Predicated region
      $region61: #{network_forward.1} parent=5 // pred_check
        _
      $region62: #{network_forward.1} parent=5 // pred_check_branch
        %344 = sbr.rel (%p341) target = $region64
      $region63: #{network_forward.1} parent=5 // pred_region
        %s345 = ssub.s32 %s20, 1
        %p346 = scmp.lt.s32.totalorder %s25, 1
        %s347 = scalar_select %p346, %s25, 1
        %s348 = smul.addr %s347, 2048
        %s349 = smul.addr %s348, 4
        %s350 = scalar_lea.vmem %s0, %s349
        %p351 = pneg %p46
        %p352 = pneg %p43
        %p353 = pneg %p67
        %p354 = pneg %p64
        %p355 = pneg %p88
        %p356 = pneg %p85
        %p357 = pneg %p109
        %p358 = pneg %p106
        %p359 = pneg %p130
        %p360 = pneg %p127
        %p361 = pneg %p151
        %p362 = pneg %p148
        %p363 = pneg %p172
        %p364 = pneg %p169
        %p365 = pneg %p193
        %p366 = pneg %p190
        %p367 = pneg %p214
        %p368 = pneg %p211
        %p369 = pneg %p235
        %p370 = pneg %p232
        %p371 = pneg %p256
        %p372 = pneg %p253
        %p373 = pneg %p282
        %p374 = pneg %p279
        %s375 = sand.u32 %s269, 1
        %s376 = scalar_lea.sflag [#allocation4], %s375
        %s377 = sand.u32 %s269, 1
        %s378 = scalar_lea.vmem [#allocation3], %s377
        %p379 = scmp.lt.s32.totalorder %s25, 1
        %s380 = scalar_select %p379, %s25, 1
        %s381 = smul.addr %s380, 2048
        %s382 = smul.addr %s381, 4
        %s383 = scalar_lea.vmem %s0, %s382
        %v385 = vld [vmem:[%s1] sm:$0xf]
        %v386 = vld [vmem:[%s1 + $0x4] sm:$0x1]
        %s387 = scalar_lea.vmem %s1, 8
        %v388 = vld [vmem:[%s387] sm:$0xf]
        %v389 = vld [vmem:[%s387 + $0x4] sm:$0x1]
        %s390 = scalar_lea.vmem %s1, 16
        %v391 = vld [vmem:[%s390] sm:$0xf]
        %v392 = vld [vmem:[%s390 + $0x4] sm:$0x1]
        %v393 = vld [vmem:[%s3] sm:$0xf]
        %v394 = vld [vmem:[%s3 + $0x4] sm:$0xf]
        %v395 = vld [vmem:[%s3 + $0x8] sm:$0xf]
        %v396 = vld [vmem:[%s3 + $0xc] sm:$0xf]
        %v397 = vld [vmem:[%s3 + $0x10] sm:$0xf]
        %v398 = vld [vmem:[%s3 + $0x14] sm:$0xf]
        %v399 = vld [vmem:[%s3 + $0x18] sm:$0xf]
        %v400 = vld [vmem:[%s3 + $0x1c] sm:$0xf]
        %v401 = vld [vmem:[%s3 + $0x20] sm:$0xf]
        %v402 = vld [vmem:[%s3 + $0x24] sm:$0xf]
        %v403 = vld [vmem:[%s3 + $0x28] sm:$0xf]
        %v404 = vld [vmem:[%s3 + $0x2c] sm:$0xf]
        %s405 = scalar_lea.vmem %s3, 48
        %v406 = vld [vmem:[%s405] sm:$0xf]
        %v407 = vld [vmem:[%s405 + $0x4] sm:$0xf]
        %v408 = vld [vmem:[%s405 + $0x8] sm:$0xf]
        %v409 = vld [vmem:[%s405 + $0xc] sm:$0xf]
        %v410 = vld [vmem:[%s405 + $0x10] sm:$0xf]
        %v411 = vld [vmem:[%s405 + $0x14] sm:$0xf]
        %v412 = vld [vmem:[%s405 + $0x18] sm:$0xf]
        %v413 = vld [vmem:[%s405 + $0x1c] sm:$0xf]
        %v414 = vld [vmem:[%s405 + $0x20] sm:$0xf]
        %v415 = vld [vmem:[%s405 + $0x24] sm:$0xf]
        %v416 = vld [vmem:[%s405 + $0x28] sm:$0xf]
        %v417 = vld [vmem:[%s405 + $0x2c] sm:$0xf]
        %s418 = scalar_lea.vmem %s3, 96
        %v419 = vld [vmem:[%s418] sm:$0xf]
        %v420 = vld [vmem:[%s418 + $0x4] sm:$0xf]
        %v421 = vld [vmem:[%s418 + $0x8] sm:$0xf]
        %v422 = vld [vmem:[%s418 + $0xc] sm:$0xf]
        %v423 = vld [vmem:[%s418 + $0x10] sm:$0xf]
        %v424 = vld [vmem:[%s418 + $0x14] sm:$0xf]
        %v425 = vld [vmem:[%s418 + $0x18] sm:$0xf]
        %v426 = vld [vmem:[%s418 + $0x1c] sm:$0xf]
        %v427 = vld [vmem:[%s418 + $0x20] sm:$0xf]
        %v428 = vld [vmem:[%s418 + $0x24] sm:$0xf]
        %v429 = vld [vmem:[%s418 + $0x28] sm:$0xf]
        %v430 = vld [vmem:[%s418 + $0x2c] sm:$0xf]
        %v431 = vld [vmem:[%s2] sm:$0x1]
        %v432 = vld [vmem:[%s4] sm:$0x1]
        loop: start=0, step=1, limit=126
        $region65: #{network_forward.1} parent=63 // loop_pre_header
          _
        $region66: #{network_forward.1} parent=63 // loop_header
          %s434 = sphi 0, %s438
          %p435 = scmp.ge.s32.totalorder %s434, 126
        $region67: #{network_forward.1} parent=63 // loop_header_branch
          %437 = sbr.rel (%p435) target = $region71
        $region68: #{network_forward.1} parent=63 // loop_body
          %s439 = smul.u32 %s434, 16
          %s440 = smul.addr %s439, 4
          %s441 = scalar_lea.vmem %s383, %s440
          %v442 = vld [vmem:[%s441] sm:$0xf]
          %v443 = vld [vmem:[%s441 + $0x4] sm:$0xf]
          %v444 = vld [vmem:[%s441 + $0x8] sm:$0xf]
          %v445 = vld [vmem:[%s441 + $0xc] sm:$0xf]
          %v446 = vld [vmem:[%s441 + $0x10] sm:$0xf]
          %v447 = vld [vmem:[%s441 + $0x14] sm:$0xf]
          %v448 = vld [vmem:[%s441 + $0x18] sm:$0xf]
          %v449 = vld [vmem:[%s441 + $0x1c] sm:$0xf]
          %v450 = vld [vmem:[%s441 + $0x20] sm:$0xf]
          %v451 = vld [vmem:[%s441 + $0x24] sm:$0xf]
          %v452 = vld [vmem:[%s441 + $0x28] sm:$0xf]
          %v453 = vld [vmem:[%s441 + $0x2c] sm:$0xf]
          %v454 = vld [vmem:[%s441 + $0x30] sm:$0xf]
          %v455 = vld [vmem:[%s441 + $0x34] sm:$0xf]
          %v456 = vld [vmem:[%s441 + $0x38] sm:$0xf]
          %v457 = vld [vmem:[%s441 + $0x3c] sm:$0xf]
          %s458 = sadd.s32 %s434, 1
          %s459 = smul.u32 %s458, 16
          %s460 = smul.addr %s459, 4
          %s461 = scalar_lea.vmem %s383, %s460
          %v462 = vld [vmem:[%s461] sm:$0xf]
          %v463 = vld [vmem:[%s461 + $0x4] sm:$0xf]
          %v464 = vld [vmem:[%s461 + $0x8] sm:$0xf]
          %v465 = vld [vmem:[%s461 + $0xc] sm:$0xf]
          %v466 = vld [vmem:[%s461 + $0x10] sm:$0xf]
          %v467 = vld [vmem:[%s461 + $0x14] sm:$0xf]
          %v468 = vld [vmem:[%s461 + $0x18] sm:$0xf]
          %v469 = vld [vmem:[%s461 + $0x1c] sm:$0xf]
          %v470 = vld [vmem:[%s461 + $0x20] sm:$0xf]
          %v471 = vld [vmem:[%s461 + $0x24] sm:$0xf]
          %v472 = vld [vmem:[%s461 + $0x28] sm:$0xf]
          %v473 = vld [vmem:[%s461 + $0x2c] sm:$0xf]
          %v474 = vld [vmem:[%s461 + $0x30] sm:$0xf]
          %v475 = vld [vmem:[%s461 + $0x34] sm:$0xf]
          %v476 = vld [vmem:[%s461 + $0x38] sm:$0xf]
          %v477 = vld [vmem:[%s461 + $0x3c] sm:$0xf]
          %s478 = sadd.s32 %s434, 2
          %s479 = smul.u32 %s478, 16
          %s480 = smul.addr %s479, 4
          %s481 = scalar_lea.vmem %s383, %s480
          %v482 = vld [vmem:[%s481] sm:$0xf]
          %v483 = vld [vmem:[%s481 + $0x4] sm:$0xf]
          %v484 = vld [vmem:[%s481 + $0x8] sm:$0xf]
          %v485 = vld [vmem:[%s481 + $0xc] sm:$0xf]
          %v486 = vld [vmem:[%s481 + $0x10] sm:$0xf]
          %v487 = vld [vmem:[%s481 + $0x14] sm:$0xf]
          %v488 = vld [vmem:[%s481 + $0x18] sm:$0xf]
          %v489 = vld [vmem:[%s481 + $0x1c] sm:$0xf]
          %v490 = vld [vmem:[%s481 + $0x20] sm:$0xf]
          %v491 = vld [vmem:[%s481 + $0x24] sm:$0xf]
          %v492 = vld [vmem:[%s481 + $0x28] sm:$0xf]
          %v493 = vld [vmem:[%s481 + $0x2c] sm:$0xf]
          %v494 = vld [vmem:[%s481 + $0x30] sm:$0xf]
          %v495 = vld [vmem:[%s481 + $0x34] sm:$0xf]
          %v496 = vld [vmem:[%s481 + $0x38] sm:$0xf]
          %v497 = vld [vmem:[%s481 + $0x3c] sm:$0xf]
          %v514 = vunpack.c.l.b16 %v442
          %v515 = vunpack.c.l.b16 %v443
          %v516 = vunpack.c.l.b16 %v444
          %v517 = vunpack.c.l.b16 %v445
          %v518 = vunpack.c.l.b16 %v446
          %v519 = vunpack.c.l.b16 %v447
          %v520 = vunpack.c.l.b16 %v448
          %v521 = vunpack.c.l.b16 %v449
          %v522 = vunpack.c.l.b16 %v450
          %v523 = vunpack.c.l.b16 %v451
          %v524 = vunpack.c.l.b16 %v452
          %v525 = vunpack.c.l.b16 %v453
          %v526 = vunpack.c.l.b16 %v454
          %v527 = vunpack.c.l.b16 %v455
          %v528 = vunpack.c.l.b16 %v456
          %v529 = vunpack.c.l.b16 %v457
          %v530 = vpack.c.b16 %v515, %v514
          %v531 = vpack.c.b16 %v517, %v516
          %v532 = vpack.c.b16 %v519, %v518
          %v533 = vpack.c.b16 %v521, %v520
          %v534 = vpack.c.b16 %v523, %v522
          %v535 = vpack.c.b16 %v525, %v524
          %v536 = vpack.c.b16 %v527, %v526
          %v537 = vpack.c.b16 %v529, %v528
          %vm538 = vsmask.f32 7424
          %v540 = vshrl.u32 %v530, 16
          %v542 = vshll.u32 %v530, 16
          %v544 = vrot.slane %v542, 1
          %v545 = vor.u32 %v540, %v544
          %v547 = vshll.u32 %v531, 16
          %v549 = vrot.slane %v547, 1
          %v550 = vsel %vm538, %v545, %v549
          %v551 = vshrl.u32 %v531, 16
          %v553 = vor.u32 %v551, %v549
          %v555 = vshll.u32 %v532, 16
          %v557 = vrot.slane %v555, 1
          %v558 = vsel %vm538, %v553, %v557
          %v559 = vshrl.u32 %v532, 16
          %v561 = vor.u32 %v559, %v557
          %v563 = vshll.u32 %v533, 16
          %v565 = vrot.slane %v563, 1
          %v566 = vsel %vm538, %v561, %v565
          %v567 = vshrl.u32 %v533, 16
          %v569 = vor.u32 %v567, %v565
          %v571 = vshll.u32 %v534, 16
          %v573 = vrot.slane %v571, 1
          %v574 = vsel %vm538, %v569, %v573
          %v575 = vshrl.u32 %v534, 16
          %v577 = vor.u32 %v575, %v573
          %v579 = vshll.u32 %v535, 16
          %v581 = vrot.slane %v579, 1
          %v582 = vsel %vm538, %v577, %v581
          %v583 = vshrl.u32 %v535, 16
          %v585 = vor.u32 %v583, %v581
          %v587 = vshll.u32 %v536, 16
          %v589 = vrot.slane %v587, 1
          %v590 = vsel %vm538, %v585, %v589
          %v591 = vshrl.u32 %v536, 16
          %v593 = vor.u32 %v591, %v589
          %v595 = vshll.u32 %v537, 16
          %v597 = vrot.slane %v595, 1
          %v598 = vsel %vm538, %v593, %v597
          %v599 = vshrl.u32 %v537, 16
          %v601 = vor.u32 %v599, %v597
          %602 = vrot.lane.b32.xlu0 %v550, 3
          %v603 = vpop.permute.xlu0 %602
          %604 = vrot.lane.b32.xlu0 %v558, 3
          %v605 = vpop.permute.xlu0 %604
          %606 = vrot.lane.b32.xlu0 %v566, 3
          %v607 = vpop.permute.xlu0 %606
          %608 = vrot.lane.b32.xlu0 %v574, 3
          %v609 = vpop.permute.xlu0 %608
          %610 = vrot.lane.b32.xlu0 %v582, 3
          %v611 = vpop.permute.xlu0 %610
          %612 = vrot.lane.b32.xlu0 %v590, 3
          %v613 = vpop.permute.xlu0 %612
          %614 = vrot.lane.b32.xlu0 %v598, 3
          %v615 = vpop.permute.xlu0 %614
          %616 = vrot.lane.b32.xlu0 %v601, 3
          %v617 = vpop.permute.xlu0 %616
          %vm618 = vcmask 1046528
          %v619 = vrot.slane %v530, 1
          %v620 = vrot.slane %v531, 1
          %v621 = vsel %vm618, %v619, %v620
          %v622 = vrot.slane %v532, 1
          %v623 = vsel %vm618, %v620, %v622
          %v624 = vrot.slane %v533, 1
          %v625 = vsel %vm618, %v622, %v624
          %v626 = vrot.slane %v534, 1
          %v627 = vsel %vm618, %v624, %v626
          %v628 = vrot.slane %v535, 1
          %v629 = vsel %vm618, %v626, %v628
          %v630 = vrot.slane %v536, 1
          %v631 = vsel %vm618, %v628, %v630
          %v632 = vrot.slane %v537, 1
          %v633 = vsel %vm618, %v630, %v632
          %634 = vrot.lane.b32.xlu0 %v621, 6
          %v635 = vpop.permute.xlu0 %634
          %636 = vrot.lane.b32.xlu0 %v623, 6
          %v637 = vpop.permute.xlu0 %636
          %638 = vrot.lane.b32.xlu0 %v625, 6
          %v639 = vpop.permute.xlu0 %638
          %640 = vrot.lane.b32.xlu0 %v627, 6
          %v641 = vpop.permute.xlu0 %640
          %642 = vrot.lane.b32.xlu0 %v629, 6
          %v643 = vpop.permute.xlu0 %642
          %644 = vrot.lane.b32.xlu0 %v631, 6
          %v645 = vpop.permute.xlu0 %644
          %646 = vrot.lane.b32.xlu0 %v633, 6
          %v647 = vpop.permute.xlu0 %646
          %648 = vrot.lane.b32.xlu0 %v632, 6
          %v649 = vpop.permute.xlu0 %648
          %vm650 = vcmask 23552
          %v652 = vsel %vm650, %v530, %v603
          %v654 = vsel %vm650, %v531, %v605
          %v656 = vsel %vm650, %v532, %v607
          %v658 = vsel %vm650, %v533, %v609
          %v660 = vsel %vm650, %v534, %v611
          %v662 = vsel %vm650, %v535, %v613
          %v664 = vsel %vm650, %v536, %v615
          %v666 = vsel %vm650, %v537, %v617
          %vm667 = vcmask 48128
          %v669 = vsel %vm667, %v652, %v635
          %v671 = vsel %vm667, %v654, %v637
          %v673 = vsel %vm667, %v656, %v639
          %v675 = vsel %vm667, %v658, %v641
          %v677 = vsel %vm667, %v660, %v643
          %v679 = vsel %vm667, %v662, %v645
          %v681 = vsel %vm667, %v664, %v647
          %v683 = vsel %vm667, %v666, %v649
          %v700 = vunpack.c.l.b16 %v462
          %v701 = vunpack.c.l.b16 %v463
          %v702 = vunpack.c.l.b16 %v464
          %v703 = vunpack.c.l.b16 %v465
          %v704 = vunpack.c.l.b16 %v466
          %v705 = vunpack.c.l.b16 %v467
          %v706 = vunpack.c.l.b16 %v468
          %v707 = vunpack.c.l.b16 %v469
          %v708 = vunpack.c.l.b16 %v470
          %v709 = vunpack.c.l.b16 %v471
          %v710 = vunpack.c.l.b16 %v472
          %v711 = vunpack.c.l.b16 %v473
          %v712 = vunpack.c.l.b16 %v474
          %v713 = vunpack.c.l.b16 %v475
          %v714 = vunpack.c.l.b16 %v476
          %v715 = vunpack.c.l.b16 %v477
          %v716 = vpack.c.b16 %v701, %v700
          %v717 = vpack.c.b16 %v703, %v702
          %v718 = vpack.c.b16 %v705, %v704
          %v719 = vpack.c.b16 %v707, %v706
          %v720 = vpack.c.b16 %v709, %v708
          %v721 = vpack.c.b16 %v711, %v710
          %v722 = vpack.c.b16 %v713, %v712
          %v723 = vpack.c.b16 %v715, %v714
          %v725 = vshrl.u32 %v716, 16
          %v727 = vshll.u32 %v716, 16
          %v729 = vrot.slane %v727, 1
          %v730 = vor.u32 %v725, %v729
          %v732 = vshll.u32 %v717, 16
          %v734 = vrot.slane %v732, 1
          %v735 = vsel %vm538, %v730, %v734
          %v736 = vshrl.u32 %v717, 16
          %v738 = vor.u32 %v736, %v734
          %v740 = vshll.u32 %v718, 16
          %v742 = vrot.slane %v740, 1
          %v743 = vsel %vm538, %v738, %v742
          %v744 = vshrl.u32 %v718, 16
          %v746 = vor.u32 %v744, %v742
          %v748 = vshll.u32 %v719, 16
          %v750 = vrot.slane %v748, 1
          %v751 = vsel %vm538, %v746, %v750
          %v752 = vshrl.u32 %v719, 16
          %v754 = vor.u32 %v752, %v750
          %v756 = vshll.u32 %v720, 16
          %v758 = vrot.slane %v756, 1
          %v759 = vsel %vm538, %v754, %v758
          %v760 = vshrl.u32 %v720, 16
          %v762 = vor.u32 %v760, %v758
          %v764 = vshll.u32 %v721, 16
          %v766 = vrot.slane %v764, 1
          %v767 = vsel %vm538, %v762, %v766
          %v768 = vshrl.u32 %v721, 16
          %v770 = vor.u32 %v768, %v766
          %v772 = vshll.u32 %v722, 16
          %v774 = vrot.slane %v772, 1
          %v775 = vsel %vm538, %v770, %v774
          %v776 = vshrl.u32 %v722, 16
          %v778 = vor.u32 %v776, %v774
          %v780 = vshll.u32 %v723, 16
          %v782 = vrot.slane %v780, 1
          %v783 = vsel %vm538, %v778, %v782
          %v784 = vshrl.u32 %v723, 16
          %v786 = vor.u32 %v784, %v782
          %787 = vrot.lane.b32.xlu0 %v735, 3
          %v788 = vpop.permute.xlu0 %787
          %789 = vrot.lane.b32.xlu0 %v743, 3
          %v790 = vpop.permute.xlu0 %789
          %791 = vrot.lane.b32.xlu0 %v751, 3
          %v792 = vpop.permute.xlu0 %791
          %793 = vrot.lane.b32.xlu0 %v759, 3
          %v794 = vpop.permute.xlu0 %793
          %795 = vrot.lane.b32.xlu0 %v767, 3
          %v796 = vpop.permute.xlu0 %795
          %797 = vrot.lane.b32.xlu0 %v775, 3
          %v798 = vpop.permute.xlu0 %797
          %799 = vrot.lane.b32.xlu0 %v783, 3
          %v800 = vpop.permute.xlu0 %799
          %801 = vrot.lane.b32.xlu0 %v786, 3
          %v802 = vpop.permute.xlu0 %801
          %v803 = vrot.slane %v716, 1
          %v804 = vrot.slane %v717, 1
          %v805 = vsel %vm618, %v803, %v804
          %v806 = vrot.slane %v718, 1
          %v807 = vsel %vm618, %v804, %v806
          %v808 = vrot.slane %v719, 1
          %v809 = vsel %vm618, %v806, %v808
          %v810 = vrot.slane %v720, 1
          %v811 = vsel %vm618, %v808, %v810
          %v812 = vrot.slane %v721, 1
          %v813 = vsel %vm618, %v810, %v812
          %v814 = vrot.slane %v722, 1
          %v815 = vsel %vm618, %v812, %v814
          %v816 = vrot.slane %v723, 1
          %v817 = vsel %vm618, %v814, %v816
          %818 = vrot.lane.b32.xlu0 %v805, 6
          %v819 = vpop.permute.xlu0 %818
          %820 = vrot.lane.b32.xlu0 %v807, 6
          %v821 = vpop.permute.xlu0 %820
          %822 = vrot.lane.b32.xlu0 %v809, 6
          %v823 = vpop.permute.xlu0 %822
          %824 = vrot.lane.b32.xlu0 %v811, 6
          %v825 = vpop.permute.xlu0 %824
          %826 = vrot.lane.b32.xlu0 %v813, 6
          %v827 = vpop.permute.xlu0 %826
          %828 = vrot.lane.b32.xlu0 %v815, 6
          %v829 = vpop.permute.xlu0 %828
          %830 = vrot.lane.b32.xlu0 %v817, 6
          %v831 = vpop.permute.xlu0 %830
          %832 = vrot.lane.b32.xlu0 %v816, 6
          %v833 = vpop.permute.xlu0 %832
          %v835 = vsel %vm650, %v716, %v788
          %v837 = vsel %vm650, %v717, %v790
          %v839 = vsel %vm650, %v718, %v792
          %v841 = vsel %vm650, %v719, %v794
          %v843 = vsel %vm650, %v720, %v796
          %v845 = vsel %vm650, %v721, %v798
          %v847 = vsel %vm650, %v722, %v800
          %v849 = vsel %vm650, %v723, %v802
          %v851 = vsel %vm667, %v835, %v819
          %v853 = vsel %vm667, %v837, %v821
          %v855 = vsel %vm667, %v839, %v823
          %v857 = vsel %vm667, %v841, %v825
          %v859 = vsel %vm667, %v843, %v827
          %v861 = vsel %vm667, %v845, %v829
          %v863 = vsel %vm667, %v847, %v831
          %v865 = vsel %vm667, %v849, %v833
          %v868 = vunpack.c.l.b16 %v388
          %v869 = vunpack.c.l.b16 %v389
          %v870 = vpack.c.b16 %v869, %v868
          %vm871 = vcmask 72704
          %v872 = vsel %vm871, %v851, 0
          %v874 = vsel %vm871, %v853, 0
          %v876 = vsel %vm871, %v855, 0
          %v878 = vsel %vm871, %v857, 0
          %v880 = vsel %vm871, %v859, 0
          %v882 = vsel %vm871, %v861, 0
          %v884 = vsel %vm871, %v863, 0
          %v886 = vsel %vm871, %v865, 0
          %vm888 = vcmask 1043456
          %vm889 = vcmask 1044480
          %v890 = vsel %vm888, 4294967295, 65535
          %v891 = vsel %vm889, %v890, 0
          %v893 = vand.u32 %v870, %v891
          %895 = vmatprep.subr.bf16.mxu0 0
          %896 = vmatpush1.bf16.msra.mxu0 %v893
          %897 = vmatprep.subr.bf16.mxu0 0
          %898 = vmatpush1.bf16.msra.mxu0 0
          %899 = vmatprep.subr.bf16.mxu0 0
          %900 = vmatpush1.bf16.msra.mxu0 0
          %901 = vmatprep.subr.bf16.mxu0 0
          %902 = vmatpush1.bf16.msra.mxu0 0
          %903 = vmatprep.subr.bf16.mxu0 0
          %904 = vmatpush1.bf16.msra.mxu0 0
          %905 = vmatprep.subr.bf16.mxu0 0
          %906 = vmatpush1.bf16.msra.mxu0 0
          %907 = vmatprep.subr.bf16.mxu0 0
          %908 = vmatpush1.bf16.msra.mxu0 0
          %909 = vmatprep.subr.bf16.mxu0 0
          %910 = vmatpush1.bf16.msra.mxu0 0
          %911 = vmatprep.subr.bf16.mxu0 0
          %912 = vmatpush1.bf16.msra.mxu0 0
          %913 = vmatprep.subr.bf16.mxu0 0
          %914 = vmatpush1.bf16.msra.mxu0 0
          %915 = vmatprep.subr.bf16.mxu0 0
          %916 = vmatpush1.bf16.msra.mxu0 0
          %917 = vmatprep.subr.bf16.mxu0 0
          %918 = vmatpush1.bf16.msra.mxu0 0
          %919 = vmatprep.subr.bf16.mxu0 0
          %920 = vmatpush1.bf16.msra.mxu0 0
          %921 = vmatprep.subr.bf16.mxu0 0
          %922 = vmatpush1.bf16.msra.mxu0 0
          %923 = vmatprep.subr.bf16.mxu0 0
          %924 = vmatpush1.bf16.msra.mxu0 0
          %925 = vmatprep.subr.bf16.mxu0 0
          %926 = vmatpush1.bf16.msra.mxu0 0
          %927 = vmatprep.mubr.bf16.mxu0 0
          %928 = vmatmul.mubr.bf16.gmra.mrb[0].mxu0 %v872
          %v929 = vpop.f32.mrb[0].mxu0
          %v930 = vadd.f32 0.0, %v929
          %v931 = vpop.f32.mrb[0].mxu0
          %v932 = vpop.f32.mrb[0].mxu0
          %v933 = vadd.f32 0.0, %v932
          %v934 = vpop.f32.mrb[0].mxu0
          %935 = vmatprep.mubr.bf16.mxu0 0
          %936 = vmatmul.mubr.bf16.gmra.mrb[0].mxu0 %v874
          %v937 = vpop.f32.mrb[0].mxu0
          %v938 = vadd.f32 0.0, %v937
          %v939 = vpop.f32.mrb[0].mxu0
          %v940 = vpop.f32.mrb[0].mxu0
          %v941 = vadd.f32 0.0, %v940
          %v942 = vpop.f32.mrb[0].mxu0
          %943 = vmatprep.mubr.bf16.mxu0 0
          %944 = vmatmul.mubr.bf16.gmra.mrb[0].mxu0 %v876
          %v945 = vpop.f32.mrb[0].mxu0
          %v946 = vadd.f32 0.0, %v945
          %v947 = vpop.f32.mrb[0].mxu0
          %v948 = vpop.f32.mrb[0].mxu0
          %v949 = vadd.f32 0.0, %v948
          %v950 = vpop.f32.mrb[0].mxu0
          %951 = vmatprep.mubr.bf16.mxu0 0
          %952 = vmatmul.mubr.bf16.gmra.mrb[0].mxu0 %v878
          %v953 = vpop.f32.mrb[0].mxu0
          %v954 = vadd.f32 0.0, %v953
          %v955 = vpop.f32.mrb[0].mxu0
          %v956 = vpop.f32.mrb[0].mxu0
          %v957 = vadd.f32 0.0, %v956
          %v958 = vpop.f32.mrb[0].mxu0
          %959 = vmatprep.mubr.bf16.mxu0 0
          %960 = vmatmul.mubr.bf16.gmra.mrb[0].mxu0 %v880
          %v961 = vpop.f32.mrb[0].mxu0
          %v962 = vadd.f32 0.0, %v961
          %v963 = vpop.f32.mrb[0].mxu0
          %v964 = vpop.f32.mrb[0].mxu0
          %v965 = vadd.f32 0.0, %v964
          %v966 = vpop.f32.mrb[0].mxu0
          %967 = vmatprep.mubr.bf16.mxu0 0
          %968 = vmatmul.mubr.bf16.gmra.mrb[0].mxu0 %v882
          %v969 = vpop.f32.mrb[0].mxu0
          %v970 = vadd.f32 0.0, %v969
          %v971 = vpop.f32.mrb[0].mxu0
          %v972 = vpop.f32.mrb[0].mxu0
          %v973 = vadd.f32 0.0, %v972
          %v974 = vpop.f32.mrb[0].mxu0
          %975 = vmatprep.mubr.bf16.mxu0 0
          %976 = vmatmul.mubr.bf16.gmra.mrb[0].mxu0 %v884
          %v977 = vpop.f32.mrb[0].mxu0
          %v978 = vadd.f32 0.0, %v977
          %v979 = vpop.f32.mrb[0].mxu0
          %v980 = vpop.f32.mrb[0].mxu0
          %v981 = vadd.f32 0.0, %v980
          %v982 = vpop.f32.mrb[0].mxu0
          %983 = vmatprep.mubr.bf16.mxu0 0
          %984 = vmatmul.mubr.bf16.gmra.mrb[0].mxu0 %v886
          %v985 = vpop.f32.mrb[0].mxu0
          %v986 = vadd.f32 0.0, %v985
          %v987 = vpop.f32.mrb[0].mxu0
          %v988 = vpop.f32.mrb[0].mxu0
          %v989 = vadd.f32 0.0, %v988
          %v990 = vpop.f32.mrb[0].mxu0
          %991 = vdwg.mxu0
          %v994 = vunpack.c.l.b16 %v385
          %v995 = vunpack.c.l.b16 %v386
          %v996 = vpack.c.b16 %v995, %v994
          %v997 = vsel %vm871, %v669, 0
          %v999 = vsel %vm871, %v671, 0
          %v1001 = vsel %vm871, %v673, 0
          %v1003 = vsel %vm871, %v675, 0
          %v1005 = vsel %vm871, %v677, 0
          %v1007 = vsel %vm871, %v679, 0
          %v1009 = vsel %vm871, %v681, 0
          %v1011 = vsel %vm871, %v683, 0
          %v1014 = vand.u32 %v996, %v891
          %1016 = vmatprep.subr.bf16.mxu0 0
          %1017 = vmatpush1.bf16.msra.mxu0 %v1014
          %1018 = vmatprep.subr.bf16.mxu0 0
          %1019 = vmatpush1.bf16.msra.mxu0 0
          %1020 = vmatprep.subr.bf16.mxu0 0
          %1021 = vmatpush1.bf16.msra.mxu0 0
          %1022 = vmatprep.subr.bf16.mxu0 0
          %1023 = vmatpush1.bf16.msra.mxu0 0
          %1024 = vmatprep.subr.bf16.mxu0 0
          %1025 = vmatpush1.bf16.msra.mxu0 0
          %1026 = vmatprep.subr.bf16.mxu0 0
          %1027 = vmatpush1.bf16.msra.mxu0 0
          %1028 = vmatprep.subr.bf16.mxu0 0
          %1029 = vmatpush1.bf16.msra.mxu0 0
          %1030 = vmatprep.subr.bf16.mxu0 0
          %1031 = vmatpush1.bf16.msra.mxu0 0
          %1032 = vmatprep.subr.bf16.mxu0 0
          %1033 = vmatpush1.bf16.msra.mxu0 0
          %1034 = vmatprep.subr.bf16.mxu0 0
          %1035 = vmatpush1.bf16.msra.mxu0 0
          %1036 = vmatprep.subr.bf16.mxu0 0
          %1037 = vmatpush1.bf16.msra.mxu0 0
          %1038 = vmatprep.subr.bf16.mxu0 0
          %1039 = vmatpush1.bf16.msra.mxu0 0
          %1040 = vmatprep.subr.bf16.mxu0 0
          %1041 = vmatpush1.bf16.msra.mxu0 0
          %1042 = vmatprep.subr.bf16.mxu0 0
          %1043 = vmatpush1.bf16.msra.mxu0 0
          %1044 = vmatprep.subr.bf16.mxu0 0
          %1045 = vmatpush1.bf16.msra.mxu0 0
          %1046 = vmatprep.subr.bf16.mxu0 0
          %1047 = vmatpush1.bf16.msra.mxu0 0
          %1048 = vmatprep.mubr.bf16.mxu0 0
          %1049 = vmatmul.mubr.bf16.gmra.mrb[0].mxu0 %v997
          %v1050 = vpop.f32.mrb[0].mxu0
          %v1051 = vadd.f32 %v930, %v1050
          %v1052 = vpop.f32.mrb[0].mxu0
          %v1053 = vpop.f32.mrb[0].mxu0
          %v1054 = vadd.f32 %v933, %v1053
          %v1055 = vpop.f32.mrb[0].mxu0
          %1056 = vmatprep.mubr.bf16.mxu0 0
          %1057 = vmatmul.mubr.bf16.gmra.mrb[0].mxu0 %v999
          %v1058 = vpop.f32.mrb[0].mxu0
          %v1059 = vadd.f32 %v938, %v1058
          %v1060 = vpop.f32.mrb[0].mxu0
          %v1061 = vpop.f32.mrb[0].mxu0
          %v1062 = vadd.f32 %v941, %v1061
          %v1063 = vpop.f32.mrb[0].mxu0
          %1064 = vmatprep.mubr.bf16.mxu0 0
          %1065 = vmatmul.mubr.bf16.gmra.mrb[0].mxu0 %v1001
          %v1066 = vpop.f32.mrb[0].mxu0
          %v1067 = vadd.f32 %v946, %v1066
          %v1068 = vpop.f32.mrb[0].mxu0
          %v1069 = vpop.f32.mrb[0].mxu0
          %v1070 = vadd.f32 %v949, %v1069
          %v1071 = vpop.f32.mrb[0].mxu0
          %1072 = vmatprep.mubr.bf16.mxu0 0
          %1073 = vmatmul.mubr.bf16.gmra.mrb[0].mxu0 %v1003
          %v1074 = vpop.f32.mrb[0].mxu0
          %v1075 = vadd.f32 %v954, %v1074
          %v1076 = vpop.f32.mrb[0].mxu0
          %v1077 = vpop.f32.mrb[0].mxu0
          %v1078 = vadd.f32 %v957, %v1077
          %v1079 = vpop.f32.mrb[0].mxu0
          %1080 = vmatprep.mubr.bf16.mxu0 0
          %1081 = vmatmul.mubr.bf16.gmra.mrb[0].mxu0 %v1005
          %v1082 = vpop.f32.mrb[0].mxu0
          %v1083 = vadd.f32 %v962, %v1082
          %v1084 = vpop.f32.mrb[0].mxu0
          %v1085 = vpop.f32.mrb[0].mxu0
          %v1086 = vadd.f32 %v965, %v1085
          %v1087 = vpop.f32.mrb[0].mxu0
          %1088 = vmatprep.mubr.bf16.mxu0 0
          %1089 = vmatmul.mubr.bf16.gmra.mrb[0].mxu0 %v1007
          %v1090 = vpop.f32.mrb[0].mxu0
          %v1091 = vadd.f32 %v970, %v1090
          %v1092 = vpop.f32.mrb[0].mxu0
          %v1093 = vpop.f32.mrb[0].mxu0
          %v1094 = vadd.f32 %v973, %v1093
          %v1095 = vpop.f32.mrb[0].mxu0
          %1096 = vmatprep.mubr.bf16.mxu0 0
          %1097 = vmatmul.mubr.bf16.gmra.mrb[0].mxu0 %v1009
          %v1098 = vpop.f32.mrb[0].mxu0
          %v1099 = vadd.f32 %v978, %v1098
          %v1100 = vpop.f32.mrb[0].mxu0
          %v1101 = vpop.f32.mrb[0].mxu0
          %v1102 = vadd.f32 %v981, %v1101
          %v1103 = vpop.f32.mrb[0].mxu0
          %1104 = vmatprep.mubr.bf16.mxu0 0
          %1105 = vmatmul.mubr.bf16.gmra.mrb[0].mxu0 %v1011
          %v1106 = vpop.f32.mrb[0].mxu0
          %v1107 = vadd.f32 %v986, %v1106
          %v1108 = vpop.f32.mrb[0].mxu0
          %v1109 = vpop.f32.mrb[0].mxu0
          %v1110 = vadd.f32 %v989, %v1109
          %v1111 = vpop.f32.mrb[0].mxu0
          %1112 = vdwg.mxu0
          %v1129 = vunpack.c.l.b16 %v482
          %v1130 = vunpack.c.l.b16 %v483
          %v1131 = vunpack.c.l.b16 %v484
          %v1132 = vunpack.c.l.b16 %v485
          %v1133 = vunpack.c.l.b16 %v486
          %v1134 = vunpack.c.l.b16 %v487
          %v1135 = vunpack.c.l.b16 %v488
          %v1136 = vunpack.c.l.b16 %v489
          %v1137 = vunpack.c.l.b16 %v490
          %v1138 = vunpack.c.l.b16 %v491
          %v1139 = vunpack.c.l.b16 %v492
          %v1140 = vunpack.c.l.b16 %v493
          %v1141 = vunpack.c.l.b16 %v494
          %v1142 = vunpack.c.l.b16 %v495
          %v1143 = vunpack.c.l.b16 %v496
          %v1144 = vunpack.c.l.b16 %v497
          %v1145 = vpack.c.b16 %v1130, %v1129
          %v1146 = vpack.c.b16 %v1132, %v1131
          %v1147 = vpack.c.b16 %v1134, %v1133
          %v1148 = vpack.c.b16 %v1136, %v1135
          %v1149 = vpack.c.b16 %v1138, %v1137
          %v1150 = vpack.c.b16 %v1140, %v1139
          %v1151 = vpack.c.b16 %v1142, %v1141
          %v1152 = vpack.c.b16 %v1144, %v1143
          %v1154 = vshrl.u32 %v1145, 16
          %v1156 = vshll.u32 %v1145, 16
          %v1158 = vrot.slane %v1156, 1
          %v1159 = vor.u32 %v1154, %v1158
          %v1161 = vshll.u32 %v1146, 16
          %v1163 = vrot.slane %v1161, 1
          %v1164 = vsel %vm538, %v1159, %v1163
          %v1165 = vshrl.u32 %v1146, 16
          %v1167 = vor.u32 %v1165, %v1163
          %v1169 = vshll.u32 %v1147, 16
          %v1171 = vrot.slane %v1169, 1
          %v1172 = vsel %vm538, %v1167, %v1171
          %v1173 = vshrl.u32 %v1147, 16
          %v1175 = vor.u32 %v1173, %v1171
          %v1177 = vshll.u32 %v1148, 16
          %v1179 = vrot.slane %v1177, 1
          %v1180 = vsel %vm538, %v1175, %v1179
          %v1181 = vshrl.u32 %v1148, 16
          %v1183 = vor.u32 %v1181, %v1179
          %v1185 = vshll.u32 %v1149, 16
          %v1187 = vrot.slane %v1185, 1
          %v1188 = vsel %vm538, %v1183, %v1187
          %v1189 = vshrl.u32 %v1149, 16
          %v1191 = vor.u32 %v1189, %v1187
          %v1193 = vshll.u32 %v1150, 16
          %v1195 = vrot.slane %v1193, 1
          %v1196 = vsel %vm538, %v1191, %v1195
          %v1197 = vshrl.u32 %v1150, 16
          %v1199 = vor.u32 %v1197, %v1195
          %v1201 = vshll.u32 %v1151, 16
          %v1203 = vrot.slane %v1201, 1
          %v1204 = vsel %vm538, %v1199, %v1203
          %v1205 = vshrl.u32 %v1151, 16
          %v1207 = vor.u32 %v1205, %v1203
          %v1209 = vshll.u32 %v1152, 16
          %v1211 = vrot.slane %v1209, 1
          %v1212 = vsel %vm538, %v1207, %v1211
          %v1213 = vshrl.u32 %v1152, 16
          %v1215 = vor.u32 %v1213, %v1211
          %1216 = vrot.lane.b32.xlu0 %v1164, 3
          %v1217 = vpop.permute.xlu0 %1216
          %1218 = vrot.lane.b32.xlu0 %v1172, 3
          %v1219 = vpop.permute.xlu0 %1218
          %1220 = vrot.lane.b32.xlu0 %v1180, 3
          %v1221 = vpop.permute.xlu0 %1220
          %1222 = vrot.lane.b32.xlu0 %v1188, 3
          %v1223 = vpop.permute.xlu0 %1222
          %1224 = vrot.lane.b32.xlu0 %v1196, 3
          %v1225 = vpop.permute.xlu0 %1224
          %1226 = vrot.lane.b32.xlu0 %v1204, 3
          %v1227 = vpop.permute.xlu0 %1226
          %1228 = vrot.lane.b32.xlu0 %v1212, 3
          %v1229 = vpop.permute.xlu0 %1228
          %1230 = vrot.lane.b32.xlu0 %v1215, 3
          %v1231 = vpop.permute.xlu0 %1230
          %v1232 = vrot.slane %v1145, 1
          %v1233 = vrot.slane %v1146, 1
          %v1234 = vsel %vm618, %v1232, %v1233
          %v1235 = vrot.slane %v1147, 1
          %v1236 = vsel %vm618, %v1233, %v1235
          %v1237 = vrot.slane %v1148, 1
          %v1238 = vsel %vm618, %v1235, %v1237
          %v1239 = vrot.slane %v1149, 1
          %v1240 = vsel %vm618, %v1237, %v1239
          %v1241 = vrot.slane %v1150, 1
          %v1242 = vsel %vm618, %v1239, %v1241
          %v1243 = vrot.slane %v1151, 1
          %v1244 = vsel %vm618, %v1241, %v1243
          %v1245 = vrot.slane %v1152, 1
          %v1246 = vsel %vm618, %v1243, %v1245
          %1247 = vrot.lane.b32.xlu0 %v1234, 6
          %v1248 = vpop.permute.xlu0 %1247
          %1249 = vrot.lane.b32.xlu0 %v1236, 6
          %v1250 = vpop.permute.xlu0 %1249
          %1251 = vrot.lane.b32.xlu0 %v1238, 6
          %v1252 = vpop.permute.xlu0 %1251
          %1253 = vrot.lane.b32.xlu0 %v1240, 6
          %v1254 = vpop.permute.xlu0 %1253
          %1255 = vrot.lane.b32.xlu0 %v1242, 6
          %v1256 = vpop.permute.xlu0 %1255
          %1257 = vrot.lane.b32.xlu0 %v1244, 6
          %v1258 = vpop.permute.xlu0 %1257
          %1259 = vrot.lane.b32.xlu0 %v1246, 6
          %v1260 = vpop.permute.xlu0 %1259
          %1261 = vrot.lane.b32.xlu0 %v1245, 6
          %v1262 = vpop.permute.xlu0 %1261
          %v1264 = vsel %vm650, %v1145, %v1217
          %v1266 = vsel %vm650, %v1146, %v1219
          %v1268 = vsel %vm650, %v1147, %v1221
          %v1270 = vsel %vm650, %v1148, %v1223
          %v1272 = vsel %vm650, %v1149, %v1225
          %v1274 = vsel %vm650, %v1150, %v1227
          %v1276 = vsel %vm650, %v1151, %v1229
          %v1278 = vsel %vm650, %v1152, %v1231
          %v1280 = vsel %vm667, %v1264, %v1248
          %v1282 = vsel %vm667, %v1266, %v1250
          %v1284 = vsel %vm667, %v1268, %v1252
          %v1286 = vsel %vm667, %v1270, %v1254
          %v1288 = vsel %vm667, %v1272, %v1256
          %v1290 = vsel %vm667, %v1274, %v1258
          %v1292 = vsel %vm667, %v1276, %v1260
          %v1294 = vsel %vm667, %v1278, %v1262
          %v1297 = vunpack.c.l.b16 %v391
          %v1298 = vunpack.c.l.b16 %v392
          %v1299 = vpack.c.b16 %v1298, %v1297
          %v1300 = vsel %vm871, %v1280, 0
          %v1302 = vsel %vm871, %v1282, 0
          %v1304 = vsel %vm871, %v1284, 0
          %v1306 = vsel %vm871, %v1286, 0
          %v1308 = vsel %vm871, %v1288, 0
          %v1310 = vsel %vm871, %v1290, 0
          %v1312 = vsel %vm871, %v1292, 0
          %v1314 = vsel %vm871, %v1294, 0
          %v1317 = vand.u32 %v1299, %v891
          %1319 = vmatprep.subr.bf16.mxu0 0
          %1320 = vmatpush1.bf16.msra.mxu0 %v1317
          %1321 = vmatprep.subr.bf16.mxu0 0
          %1322 = vmatpush1.bf16.msra.mxu0 0
          %1323 = vmatprep.subr.bf16.mxu0 0
          %1324 = vmatpush1.bf16.msra.mxu0 0
          %1325 = vmatprep.subr.bf16.mxu0 0
          %1326 = vmatpush1.bf16.msra.mxu0 0
          %1327 = vmatprep.subr.bf16.mxu0 0
          %1328 = vmatpush1.bf16.msra.mxu0 0
          %1329 = vmatprep.subr.bf16.mxu0 0
          %1330 = vmatpush1.bf16.msra.mxu0 0
          %1331 = vmatprep.subr.bf16.mxu0 0
          %1332 = vmatpush1.bf16.msra.mxu0 0
          %1333 = vmatprep.subr.bf16.mxu0 0
          %1334 = vmatpush1.bf16.msra.mxu0 0
          %1335 = vmatprep.subr.bf16.mxu0 0
          %1336 = vmatpush1.bf16.msra.mxu0 0
          %1337 = vmatprep.subr.bf16.mxu0 0
          %1338 = vmatpush1.bf16.msra.mxu0 0
          %1339 = vmatprep.subr.bf16.mxu0 0
          %1340 = vmatpush1.bf16.msra.mxu0 0
          %1341 = vmatprep.subr.bf16.mxu0 0
          %1342 = vmatpush1.bf16.msra.mxu0 0
          %1343 = vmatprep.subr.bf16.mxu0 0
          %1344 = vmatpush1.bf16.msra.mxu0 0
          %1345 = vmatprep.subr.bf16.mxu0 0
          %1346 = vmatpush1.bf16.msra.mxu0 0
          %1347 = vmatprep.subr.bf16.mxu0 0
          %1348 = vmatpush1.bf16.msra.mxu0 0
          %1349 = vmatprep.subr.bf16.mxu0 0
          %1350 = vmatpush1.bf16.msra.mxu0 0
          %1351 = vmatprep.mubr.bf16.mxu0 0
          %1352 = vmatmul.mubr.bf16.gmra.mrb[0].mxu0 %v1300
          %v1353 = vpop.f32.mrb[0].mxu0
          %v1354 = vadd.f32 0.0, %v1353
          %v1355 = vpop.f32.mrb[0].mxu0
          %v1356 = vpop.f32.mrb[0].mxu0
          %v1357 = vadd.f32 0.0, %v1356
          %v1358 = vpop.f32.mrb[0].mxu0
          %1359 = vmatprep.mubr.bf16.mxu0 0
          %1360 = vmatmul.mubr.bf16.gmra.mrb[0].mxu0 %v1302
          %v1361 = vpop.f32.mrb[0].mxu0
          %v1362 = vadd.f32 0.0, %v1361
          %v1363 = vpop.f32.mrb[0].mxu0
          %v1364 = vpop.f32.mrb[0].mxu0
          %v1365 = vadd.f32 0.0, %v1364
          %v1366 = vpop.f32.mrb[0].mxu0
          %1367 = vmatprep.mubr.bf16.mxu0 0
          %1368 = vmatmul.mubr.bf16.gmra.mrb[0].mxu0 %v1304
          %v1369 = vpop.f32.mrb[0].mxu0
          %v1370 = vadd.f32 0.0, %v1369
          %v1371 = vpop.f32.mrb[0].mxu0
          %v1372 = vpop.f32.mrb[0].mxu0
          %v1373 = vadd.f32 0.0, %v1372
          %v1374 = vpop.f32.mrb[0].mxu0
          %1375 = vmatprep.mubr.bf16.mxu0 0
          %1376 = vmatmul.mubr.bf16.gmra.mrb[0].mxu0 %v1306
          %v1377 = vpop.f32.mrb[0].mxu0
          %v1378 = vadd.f32 0.0, %v1377
          %v1379 = vpop.f32.mrb[0].mxu0
          %v1380 = vpop.f32.mrb[0].mxu0
          %v1381 = vadd.f32 0.0, %v1380
          %v1382 = vpop.f32.mrb[0].mxu0
          %1383 = vmatprep.mubr.bf16.mxu0 0
          %1384 = vmatmul.mubr.bf16.gmra.mrb[0].mxu0 %v1308
          %v1385 = vpop.f32.mrb[0].mxu0
          %v1386 = vadd.f32 0.0, %v1385
          %v1387 = vpop.f32.mrb[0].mxu0
          %v1388 = vpop.f32.mrb[0].mxu0
          %v1389 = vadd.f32 0.0, %v1388
          %v1390 = vpop.f32.mrb[0].mxu0
          %1391 = vmatprep.mubr.bf16.mxu0 0
          %1392 = vmatmul.mubr.bf16.gmra.mrb[0].mxu0 %v1310
          %v1393 = vpop.f32.mrb[0].mxu0
          %v1394 = vadd.f32 0.0, %v1393
          %v1395 = vpop.f32.mrb[0].mxu0
          %v1396 = vpop.f32.mrb[0].mxu0
          %v1397 = vadd.f32 0.0, %v1396
          %v1398 = vpop.f32.mrb[0].mxu0
          %1399 = vmatprep.mubr.bf16.mxu0 0
          %1400 = vmatmul.mubr.bf16.gmra.mrb[0].mxu0 %v1312
          %v1401 = vpop.f32.mrb[0].mxu0
          %v1402 = vadd.f32 0.0, %v1401
          %v1403 = vpop.f32.mrb[0].mxu0
          %v1404 = vpop.f32.mrb[0].mxu0
          %v1405 = vadd.f32 0.0, %v1404
          %v1406 = vpop.f32.mrb[0].mxu0
          %1407 = vmatprep.mubr.bf16.mxu0 0
          %1408 = vmatmul.mubr.bf16.gmra.mrb[0].mxu0 %v1314
          %v1409 = vpop.f32.mrb[0].mxu0
          %v1410 = vadd.f32 0.0, %v1409
          %v1411 = vpop.f32.mrb[0].mxu0
          %v1412 = vpop.f32.mrb[0].mxu0
          %v1413 = vadd.f32 0.0, %v1412
          %v1414 = vpop.f32.mrb[0].mxu0
          %1415 = vdwg.mxu0
          %v1416 = vadd.f32 %v1051, %v1354
          %v1417 = vadd.f32 %v1054, %v1357
          %v1418 = vadd.f32 %v1059, %v1362
          %v1419 = vadd.f32 %v1062, %v1365
          %v1420 = vadd.f32 %v1067, %v1370
          %v1421 = vadd.f32 %v1070, %v1373
          %v1422 = vadd.f32 %v1075, %v1378
          %v1423 = vadd.f32 %v1078, %v1381
          %v1424 = vadd.f32 %v1083, %v1386
          %v1425 = vadd.f32 %v1086, %v1389
          %v1426 = vadd.f32 %v1091, %v1394
          %v1427 = vadd.f32 %v1094, %v1397
          %v1428 = vadd.f32 %v1099, %v1402
          %v1429 = vadd.f32 %v1102, %v1405
          %v1430 = vadd.f32 %v1107, %v1410
          %v1431 = vadd.f32 %v1110, %v1413
          %v1433 = vlaneseq
          %v1434 = vshrl.u32 %v1433, 7
          %v1435 = vsub.s32 0, %v1434
          %v1436 = vrot.slane %v431, %v1435
          %v1438 = vadd.f32 %v1416, %v1436
          %v1439 = vadd.f32 %v1417, %v1436
          %v1440 = vadd.f32 %v1418, %v1436
          %v1441 = vadd.f32 %v1419, %v1436
          %v1442 = vadd.f32 %v1420, %v1436
          %v1443 = vadd.f32 %v1421, %v1436
          %v1444 = vadd.f32 %v1422, %v1436
          %v1445 = vadd.f32 %v1423, %v1436
          %v1446 = vadd.f32 %v1424, %v1436
          %v1447 = vadd.f32 %v1425, %v1436
          %v1448 = vadd.f32 %v1426, %v1436
          %v1449 = vadd.f32 %v1427, %v1436
          %v1450 = vadd.f32 %v1428, %v1436
          %v1451 = vadd.f32 %v1429, %v1436
          %v1452 = vadd.f32 %v1430, %v1436
          %v1453 = vadd.f32 %v1431, %v1436
          %v1454 = vmax.f32 %v1438, 0.0
          %v1455 = vmax.f32 %v1439, 0.0
          %v1456 = vmax.f32 %v1440, 0.0
          %v1457 = vmax.f32 %v1441, 0.0
          %v1458 = vmax.f32 %v1442, 0.0
          %v1459 = vmax.f32 %v1443, 0.0
          %v1460 = vmax.f32 %v1444, 0.0
          %v1461 = vmax.f32 %v1445, 0.0
          %v1462 = vmax.f32 %v1446, 0.0
          %v1463 = vmax.f32 %v1447, 0.0
          %v1464 = vmax.f32 %v1448, 0.0
          %v1465 = vmax.f32 %v1449, 0.0
          %v1466 = vmax.f32 %v1450, 0.0
          %v1467 = vmax.f32 %v1451, 0.0
          %v1468 = vmax.f32 %v1452, 0.0
          %v1469 = vmax.f32 %v1453, 0.0
          %v1470 = vpack.c.bf16 %v1455, %v1454
          %v1471 = vpack.c.bf16 %v1457, %v1456
          %v1472 = vpack.c.bf16 %v1459, %v1458
          %v1473 = vpack.c.bf16 %v1461, %v1460
          %v1474 = vpack.c.bf16 %v1463, %v1462
          %v1475 = vpack.c.bf16 %v1465, %v1464
          %v1476 = vpack.c.bf16 %v1467, %v1466
          %v1477 = vpack.c.bf16 %v1469, %v1468
          %v1486 = vunpack.c.l.b16 %v1470
          %v1487 = vunpack.c.h.b16 %v1470
          %v1488 = vunpack.c.l.b16 %v1471
          %v1489 = vunpack.c.h.b16 %v1471
          %v1490 = vunpack.c.l.b16 %v1472
          %v1491 = vunpack.c.h.b16 %v1472
          %v1492 = vunpack.c.l.b16 %v1473
          %v1493 = vunpack.c.h.b16 %v1473
          %v1494 = vunpack.c.l.b16 %v1474
          %v1495 = vunpack.c.h.b16 %v1474
          %v1496 = vunpack.c.l.b16 %v1475
          %v1497 = vunpack.c.h.b16 %v1475
          %v1498 = vunpack.c.l.b16 %v1476
          %v1499 = vunpack.c.h.b16 %v1476
          %v1500 = vunpack.c.l.b16 %v1477
          %v1501 = vunpack.c.h.b16 %v1477
          %v1502 = vpack.c.b16 %v1486, %v1486
          %v1503 = vpack.c.b16 %v1487, %v1487
          %v1504 = vpack.c.b16 %v1488, %v1488
          %v1505 = vpack.c.b16 %v1489, %v1489
          %v1506 = vpack.c.b16 %v1490, %v1490
          %v1507 = vpack.c.b16 %v1491, %v1491
          %v1508 = vpack.c.b16 %v1492, %v1492
          %v1509 = vpack.c.b16 %v1493, %v1493
          %v1510 = vpack.c.b16 %v1494, %v1494
          %v1511 = vpack.c.b16 %v1495, %v1495
          %v1512 = vpack.c.b16 %v1496, %v1496
          %v1513 = vpack.c.b16 %v1497, %v1497
          %v1514 = vpack.c.b16 %v1498, %v1498
          %v1515 = vpack.c.b16 %v1499, %v1499
          %v1516 = vpack.c.b16 %v1500, %v1500
          %v1517 = vpack.c.b16 %v1501, %v1501
          %s1534 = smul.addr %s439, 4
          %s1535 = scalar_lea.vmem [#allocation2], %s1534
          %vm1536 = vcmask 257024
          %1537 = vst.msk [vmem:[%s1535] sm:$0xf] %vm1536, %v1502
          %1538 = vst.msk [vmem:[%s1535 + $0x4] sm:$0xf] %vm1536, %v1503
          %1539 = vst.msk [vmem:[%s1535 + $0x8] sm:$0xf] %vm1536, %v1504
          %1540 = vst.msk [vmem:[%s1535 + $0xc] sm:$0xf] %vm1536, %v1505
          %1541 = vst.msk [vmem:[%s1535 + $0x10] sm:$0xf] %vm1536, %v1506
          %1542 = vst.msk [vmem:[%s1535 + $0x14] sm:$0xf] %vm1536, %v1507
          %1543 = vst.msk [vmem:[%s1535 + $0x18] sm:$0xf] %vm1536, %v1508
          %1544 = vst.msk [vmem:[%s1535 + $0x1c] sm:$0xf] %vm1536, %v1509
          %1545 = vst.msk [vmem:[%s1535 + $0x20] sm:$0xf] %vm1536, %v1510
          %1546 = vst.msk [vmem:[%s1535 + $0x24] sm:$0xf] %vm1536, %v1511
          %1547 = vst.msk [vmem:[%s1535 + $0x28] sm:$0xf] %vm1536, %v1512
          %1548 = vst.msk [vmem:[%s1535 + $0x2c] sm:$0xf] %vm1536, %v1513
          %1549 = vst.msk [vmem:[%s1535 + $0x30] sm:$0xf] %vm1536, %v1514
          %1550 = vst.msk [vmem:[%s1535 + $0x34] sm:$0xf] %vm1536, %v1515
          %1551 = vst.msk [vmem:[%s1535 + $0x38] sm:$0xf] %vm1536, %v1516
          %vm1552 = vcmask 256000
          %1553 = vst.msk [vmem:[%s1535 + $0x3c] sm:$0x7] %vm1552, %v1517
        $region69: #{network_forward.1} parent=63 // loop_footer
          %s438 = sadd.s32 1, %s434
        $region70: #{network_forward.1} parent=63 // loop_footer_branch
          %433 = sbr.rel target = $region66
        $region71: #{network_forward.1} parent=63 // loop_exit
          _
        loop: start=0, step=1, limit=124
        $region72: #{network_forward.1} parent=63 // loop_pre_header
          _
        $region73: #{network_forward.1} parent=63 // loop_header
          %s1555 = sphi 0, %s1559
          %p1556 = scmp.ge.s32.totalorder %s1555, 124
          %v1560 = vphi 0.0, %v2687
          %v1561 = vphi 0.0, %v2688
          %v1562 = vphi 0.0, %v2689
          %v1563 = vphi 0.0, %v2690
          %v1564 = vphi 0.0, %v2691
          %v1565 = vphi 0.0, %v2692
          %v1566 = vphi 0.0, %v2693
          %v1567 = vphi 0.0, %v2694
          %v1568 = vphi 0.0, %v2695
          %v1569 = vphi 0.0, %v2696
          %v1570 = vphi 0.0, %v2697
          %v1571 = vphi 0.0, %v2698
          %v1572 = vphi 0.0, %v2699
          %v1573 = vphi 0.0, %v2700
          %v1574 = vphi 0.0, %v2701
          %v1575 = vphi 0.0, %v2702
        $region74: #{network_forward.1} parent=63 // loop_header_branch
          %1558 = sbr.rel (%p1556) target = $region78
        $region75: #{network_forward.1} parent=63 // loop_body
          %s1576 = smul.u32 %s1555, 16
          %s1577 = smul.addr %s1576, 4
          %s1578 = scalar_lea.vmem [#allocation2], %s1577
          %v1579 = vld [vmem:[%s1578] sm:$0xf]
          %v1580 = vld [vmem:[%s1578 + $0x4] sm:$0xf]
          %v1581 = vld [vmem:[%s1578 + $0x8] sm:$0xf]
          %v1582 = vld [vmem:[%s1578 + $0xc] sm:$0xf]
          %v1583 = vld [vmem:[%s1578 + $0x10] sm:$0xf]
          %v1584 = vld [vmem:[%s1578 + $0x14] sm:$0xf]
          %v1585 = vld [vmem:[%s1578 + $0x18] sm:$0xf]
          %v1586 = vld [vmem:[%s1578 + $0x1c] sm:$0xf]
          %v1587 = vld [vmem:[%s1578 + $0x20] sm:$0xf]
          %v1588 = vld [vmem:[%s1578 + $0x24] sm:$0xf]
          %v1589 = vld [vmem:[%s1578 + $0x28] sm:$0xf]
          %v1590 = vld [vmem:[%s1578 + $0x2c] sm:$0xf]
          %v1591 = vld [vmem:[%s1578 + $0x30] sm:$0xf]
          %v1592 = vld [vmem:[%s1578 + $0x34] sm:$0xf]
          %v1593 = vld [vmem:[%s1578 + $0x38] sm:$0xf]
          %v1594 = vld [vmem:[%s1578 + $0x3c] sm:$0x7]
          %s1595 = sadd.s32 %s1555, 1
          %s1596 = smul.u32 %s1595, 16
          %s1597 = smul.addr %s1596, 4
          %s1598 = scalar_lea.vmem [#allocation2], %s1597
          %v1599 = vld [vmem:[%s1598] sm:$0xf]
          %v1600 = vld [vmem:[%s1598 + $0x4] sm:$0xf]
          %v1601 = vld [vmem:[%s1598 + $0x8] sm:$0xf]
          %v1602 = vld [vmem:[%s1598 + $0xc] sm:$0xf]
          %v1603 = vld [vmem:[%s1598 + $0x10] sm:$0xf]
          %v1604 = vld [vmem:[%s1598 + $0x14] sm:$0xf]
          %v1605 = vld [vmem:[%s1598 + $0x18] sm:$0xf]
          %v1606 = vld [vmem:[%s1598 + $0x1c] sm:$0xf]
          %v1607 = vld [vmem:[%s1598 + $0x20] sm:$0xf]
          %v1608 = vld [vmem:[%s1598 + $0x24] sm:$0xf]
          %v1609 = vld [vmem:[%s1598 + $0x28] sm:$0xf]
          %v1610 = vld [vmem:[%s1598 + $0x2c] sm:$0xf]
          %v1611 = vld [vmem:[%s1598 + $0x30] sm:$0xf]
          %v1612 = vld [vmem:[%s1598 + $0x34] sm:$0xf]
          %v1613 = vld [vmem:[%s1598 + $0x38] sm:$0xf]
          %v1614 = vld [vmem:[%s1598 + $0x3c] sm:$0x7]
          %s1615 = sadd.s32 %s1555, 2
          %s1616 = smul.u32 %s1615, 16
          %s1617 = smul.addr %s1616, 4
          %s1618 = scalar_lea.vmem [#allocation2], %s1617
          %v1619 = vld [vmem:[%s1618] sm:$0xf]
          %v1620 = vld [vmem:[%s1618 + $0x4] sm:$0xf]
          %v1621 = vld [vmem:[%s1618 + $0x8] sm:$0xf]
          %v1622 = vld [vmem:[%s1618 + $0xc] sm:$0xf]
          %v1623 = vld [vmem:[%s1618 + $0x10] sm:$0xf]
          %v1624 = vld [vmem:[%s1618 + $0x14] sm:$0xf]
          %v1625 = vld [vmem:[%s1618 + $0x18] sm:$0xf]
          %v1626 = vld [vmem:[%s1618 + $0x1c] sm:$0xf]
          %v1627 = vld [vmem:[%s1618 + $0x20] sm:$0xf]
          %v1628 = vld [vmem:[%s1618 + $0x24] sm:$0xf]
          %v1629 = vld [vmem:[%s1618 + $0x28] sm:$0xf]
          %v1630 = vld [vmem:[%s1618 + $0x2c] sm:$0xf]
          %v1631 = vld [vmem:[%s1618 + $0x30] sm:$0xf]
          %v1632 = vld [vmem:[%s1618 + $0x34] sm:$0xf]
          %v1633 = vld [vmem:[%s1618 + $0x38] sm:$0xf]
          %v1634 = vld [vmem:[%s1618 + $0x3c] sm:$0x7]
          %v1651 = vunpack.c.l.b16 %v1579
          %v1652 = vunpack.c.l.b16 %v1580
          %v1653 = vunpack.c.l.b16 %v1581
          %v1654 = vunpack.c.l.b16 %v1582
          %v1655 = vunpack.c.l.b16 %v1583
          %v1656 = vunpack.c.l.b16 %v1584
          %v1657 = vunpack.c.l.b16 %v1585
          %v1658 = vunpack.c.l.b16 %v1586
          %v1659 = vunpack.c.l.b16 %v1587
          %v1660 = vunpack.c.l.b16 %v1588
          %v1661 = vunpack.c.l.b16 %v1589
          %v1662 = vunpack.c.l.b16 %v1590
          %v1663 = vunpack.c.l.b16 %v1591
          %v1664 = vunpack.c.l.b16 %v1592
          %v1665 = vunpack.c.l.b16 %v1593
          %v1666 = vunpack.c.l.b16 %v1594
          %v1667 = vpack.c.b16 %v1652, %v1651
          %v1668 = vpack.c.b16 %v1654, %v1653
          %v1669 = vpack.c.b16 %v1656, %v1655
          %v1670 = vpack.c.b16 %v1658, %v1657
          %v1671 = vpack.c.b16 %v1660, %v1659
          %v1672 = vpack.c.b16 %v1662, %v1661
          %v1673 = vpack.c.b16 %v1664, %v1663
          %v1674 = vpack.c.b16 %v1666, %v1665
          %vm1675 = vsmask.f32 7424
          %v1677 = vshrl.u32 %v1667, 16
          %v1679 = vshll.u32 %v1667, 16
          %v1681 = vrot.slane %v1679, 1
          %v1682 = vor.u32 %v1677, %v1681
          %v1684 = vshll.u32 %v1668, 16
          %v1686 = vrot.slane %v1684, 1
          %v1687 = vsel %vm1675, %v1682, %v1686
          %v1688 = vshrl.u32 %v1668, 16
          %v1690 = vor.u32 %v1688, %v1686
          %v1692 = vshll.u32 %v1669, 16
          %v1694 = vrot.slane %v1692, 1
          %v1695 = vsel %vm1675, %v1690, %v1694
          %v1696 = vshrl.u32 %v1669, 16
          %v1698 = vor.u32 %v1696, %v1694
          %v1700 = vshll.u32 %v1670, 16
          %v1702 = vrot.slane %v1700, 1
          %v1703 = vsel %vm1675, %v1698, %v1702
          %v1704 = vshrl.u32 %v1670, 16
          %v1706 = vor.u32 %v1704, %v1702
          %v1708 = vshll.u32 %v1671, 16
          %v1710 = vrot.slane %v1708, 1
          %v1711 = vsel %vm1675, %v1706, %v1710
          %v1712 = vshrl.u32 %v1671, 16
          %v1714 = vor.u32 %v1712, %v1710
          %v1716 = vshll.u32 %v1672, 16
          %v1718 = vrot.slane %v1716, 1
          %v1719 = vsel %vm1675, %v1714, %v1718
          %v1720 = vshrl.u32 %v1672, 16
          %v1722 = vor.u32 %v1720, %v1718
          %v1724 = vshll.u32 %v1673, 16
          %v1726 = vrot.slane %v1724, 1
          %v1727 = vsel %vm1675, %v1722, %v1726
          %v1728 = vshrl.u32 %v1673, 16
          %v1730 = vor.u32 %v1728, %v1726
          %v1732 = vshll.u32 %v1674, 16
          %v1734 = vrot.slane %v1732, 1
          %v1735 = vsel %vm1675, %v1730, %v1734
          %v1736 = vshrl.u32 %v1674, 16
          %v1738 = vor.u32 %v1736, %v1734
          %1739 = vrot.lane.b32.xlu0 %v1687, 32
          %v1740 = vpop.permute.xlu0 %1739
          %1741 = vrot.lane.b32.xlu0 %v1695, 32
          %v1742 = vpop.permute.xlu0 %1741
          %1743 = vrot.lane.b32.xlu0 %v1703, 32
          %v1744 = vpop.permute.xlu0 %1743
          %1745 = vrot.lane.b32.xlu0 %v1711, 32
          %v1746 = vpop.permute.xlu0 %1745
          %1747 = vrot.lane.b32.xlu0 %v1719, 32
          %v1748 = vpop.permute.xlu0 %1747
          %1749 = vrot.lane.b32.xlu0 %v1727, 32
          %v1750 = vpop.permute.xlu0 %1749
          %1751 = vrot.lane.b32.xlu0 %v1735, 32
          %v1752 = vpop.permute.xlu0 %1751
          %1753 = vrot.lane.b32.xlu0 %v1738, 32
          %v1754 = vpop.permute.xlu0 %1753
          %vm1755 = vcmask 1046528
          %v1756 = vrot.slane %v1667, 1
          %v1757 = vrot.slane %v1668, 1
          %v1758 = vsel %vm1755, %v1756, %v1757
          %v1759 = vrot.slane %v1669, 1
          %v1760 = vsel %vm1755, %v1757, %v1759
          %v1761 = vrot.slane %v1670, 1
          %v1762 = vsel %vm1755, %v1759, %v1761
          %v1763 = vrot.slane %v1671, 1
          %v1764 = vsel %vm1755, %v1761, %v1763
          %v1765 = vrot.slane %v1672, 1
          %v1766 = vsel %vm1755, %v1763, %v1765
          %v1767 = vrot.slane %v1673, 1
          %v1768 = vsel %vm1755, %v1765, %v1767
          %v1769 = vrot.slane %v1674, 1
          %v1770 = vsel %vm1755, %v1767, %v1769
          %1771 = vrot.lane.b32.xlu0 %v1758, 64
          %v1772 = vpop.permute.xlu0 %1771
          %1773 = vrot.lane.b32.xlu0 %v1760, 64
          %v1774 = vpop.permute.xlu0 %1773
          %1775 = vrot.lane.b32.xlu0 %v1762, 64
          %v1776 = vpop.permute.xlu0 %1775
          %1777 = vrot.lane.b32.xlu0 %v1764, 64
          %v1778 = vpop.permute.xlu0 %1777
          %1779 = vrot.lane.b32.xlu0 %v1766, 64
          %v1780 = vpop.permute.xlu0 %1779
          %1781 = vrot.lane.b32.xlu0 %v1768, 64
          %v1782 = vpop.permute.xlu0 %1781
          %1783 = vrot.lane.b32.xlu0 %v1770, 64
          %v1784 = vpop.permute.xlu0 %1783
          %1785 = vrot.lane.b32.xlu0 %v1769, 64
          %v1786 = vpop.permute.xlu0 %1785
          %vm1787 = vcmask 261120
          %v1789 = vsel %vm1787, %v1667, %v1740
          %v1791 = vsel %vm1787, %v1668, %v1742
          %v1793 = vsel %vm1787, %v1669, %v1744
          %v1795 = vsel %vm1787, %v1670, %v1746
          %v1797 = vsel %vm1787, %v1671, %v1748
          %v1799 = vsel %vm1787, %v1672, %v1750
          %v1801 = vsel %vm1787, %v1673, %v1752
          %v1803 = vsel %vm1787, %v1674, %v1754
          %vm1804 = vcmask 523264
          %v1806 = vsel %vm1804, %v1789, %v1772
          %v1808 = vsel %vm1804, %v1791, %v1774
          %v1810 = vsel %vm1804, %v1793, %v1776
          %v1812 = vsel %vm1804, %v1795, %v1778
          %v1814 = vsel %vm1804, %v1797, %v1780
          %v1816 = vsel %vm1804, %v1799, %v1782
          %v1818 = vsel %vm1804, %v1801, %v1784
          %v1820 = vsel %vm1804, %v1803, %v1786
          %v1837 = vunpack.c.l.b16 %v1599
          %v1838 = vunpack.c.l.b16 %v1600
          %v1839 = vunpack.c.l.b16 %v1601
          %v1840 = vunpack.c.l.b16 %v1602
          %v1841 = vunpack.c.l.b16 %v1603
          %v1842 = vunpack.c.l.b16 %v1604
          %v1843 = vunpack.c.l.b16 %v1605
          %v1844 = vunpack.c.l.b16 %v1606
          %v1845 = vunpack.c.l.b16 %v1607
          %v1846 = vunpack.c.l.b16 %v1608
          %v1847 = vunpack.c.l.b16 %v1609
          %v1848 = vunpack.c.l.b16 %v1610
          %v1849 = vunpack.c.l.b16 %v1611
          %v1850 = vunpack.c.l.b16 %v1612
          %v1851 = vunpack.c.l.b16 %v1613
          %v1852 = vunpack.c.l.b16 %v1614
          %v1853 = vpack.c.b16 %v1838, %v1837
          %v1854 = vpack.c.b16 %v1840, %v1839
          %v1855 = vpack.c.b16 %v1842, %v1841
          %v1856 = vpack.c.b16 %v1844, %v1843
          %v1857 = vpack.c.b16 %v1846, %v1845
          %v1858 = vpack.c.b16 %v1848, %v1847
          %v1859 = vpack.c.b16 %v1850, %v1849
          %v1860 = vpack.c.b16 %v1852, %v1851
          %v1862 = vshrl.u32 %v1853, 16
          %v1864 = vshll.u32 %v1853, 16
          %v1866 = vrot.slane %v1864, 1
          %v1867 = vor.u32 %v1862, %v1866
          %v1869 = vshll.u32 %v1854, 16
          %v1871 = vrot.slane %v1869, 1
          %v1872 = vsel %vm1675, %v1867, %v1871
          %v1873 = vshrl.u32 %v1854, 16
          %v1875 = vor.u32 %v1873, %v1871
          %v1877 = vshll.u32 %v1855, 16
          %v1879 = vrot.slane %v1877, 1
          %v1880 = vsel %vm1675, %v1875, %v1879
          %v1881 = vshrl.u32 %v1855, 16
          %v1883 = vor.u32 %v1881, %v1879
          %v1885 = vshll.u32 %v1856, 16
          %v1887 = vrot.slane %v1885, 1
          %v1888 = vsel %vm1675, %v1883, %v1887
          %v1889 = vshrl.u32 %v1856, 16
          %v1891 = vor.u32 %v1889, %v1887
          %v1893 = vshll.u32 %v1857, 16
          %v1895 = vrot.slane %v1893, 1
          %v1896 = vsel %vm1675, %v1891, %v1895
          %v1897 = vshrl.u32 %v1857, 16
          %v1899 = vor.u32 %v1897, %v1895
          %v1901 = vshll.u32 %v1858, 16
          %v1903 = vrot.slane %v1901, 1
          %v1904 = vsel %vm1675, %v1899, %v1903
          %v1905 = vshrl.u32 %v1858, 16
          %v1907 = vor.u32 %v1905, %v1903
          %v1909 = vshll.u32 %v1859, 16
          %v1911 = vrot.slane %v1909, 1
          %v1912 = vsel %vm1675, %v1907, %v1911
          %v1913 = vshrl.u32 %v1859, 16
          %v1915 = vor.u32 %v1913, %v1911
          %v1917 = vshll.u32 %v1860, 16
          %v1919 = vrot.slane %v1917, 1
          %v1920 = vsel %vm1675, %v1915, %v1919
          %v1921 = vshrl.u32 %v1860, 16
          %v1923 = vor.u32 %v1921, %v1919
          %1924 = vrot.lane.b32.xlu0 %v1872, 32
          %v1925 = vpop.permute.xlu0 %1924
          %1926 = vrot.lane.b32.xlu0 %v1880, 32
          %v1927 = vpop.permute.xlu0 %1926
          %1928 = vrot.lane.b32.xlu0 %v1888, 32
          %v1929 = vpop.permute.xlu0 %1928
          %1930 = vrot.lane.b32.xlu0 %v1896, 32
          %v1931 = vpop.permute.xlu0 %1930
          %1932 = vrot.lane.b32.xlu0 %v1904, 32
          %v1933 = vpop.permute.xlu0 %1932
          %1934 = vrot.lane.b32.xlu0 %v1912, 32
          %v1935 = vpop.permute.xlu0 %1934
          %1936 = vrot.lane.b32.xlu0 %v1920, 32
          %v1937 = vpop.permute.xlu0 %1936
          %1938 = vrot.lane.b32.xlu0 %v1923, 32
          %v1939 = vpop.permute.xlu0 %1938
          %v1940 = vrot.slane %v1853, 1
          %v1941 = vrot.slane %v1854, 1
          %v1942 = vsel %vm1755, %v1940, %v1941
          %v1943 = vrot.slane %v1855, 1
          %v1944 = vsel %vm1755, %v1941, %v1943
          %v1945 = vrot.slane %v1856, 1
          %v1946 = vsel %vm1755, %v1943, %v1945
          %v1947 = vrot.slane %v1857, 1
          %v1948 = vsel %vm1755, %v1945, %v1947
          %v1949 = vrot.slane %v1858, 1
          %v1950 = vsel %vm1755, %v1947, %v1949
          %v1951 = vrot.slane %v1859, 1
          %v1952 = vsel %vm1755, %v1949, %v1951
          %v1953 = vrot.slane %v1860, 1
          %v1954 = vsel %vm1755, %v1951, %v1953
          %1955 = vrot.lane.b32.xlu0 %v1942, 64
          %v1956 = vpop.permute.xlu0 %1955
          %1957 = vrot.lane.b32.xlu0 %v1944, 64
          %v1958 = vpop.permute.xlu0 %1957
          %1959 = vrot.lane.b32.xlu0 %v1946, 64
          %v1960 = vpop.permute.xlu0 %1959
          %1961 = vrot.lane.b32.xlu0 %v1948, 64
          %v1962 = vpop.permute.xlu0 %1961
          %1963 = vrot.lane.b32.xlu0 %v1950, 64
          %v1964 = vpop.permute.xlu0 %1963
          %1965 = vrot.lane.b32.xlu0 %v1952, 64
          %v1966 = vpop.permute.xlu0 %1965
          %1967 = vrot.lane.b32.xlu0 %v1954, 64
          %v1968 = vpop.permute.xlu0 %1967
          %1969 = vrot.lane.b32.xlu0 %v1953, 64
          %v1970 = vpop.permute.xlu0 %1969
          %v1972 = vsel %vm1787, %v1853, %v1925
          %v1974 = vsel %vm1787, %v1854, %v1927
          %v1976 = vsel %vm1787, %v1855, %v1929
          %v1978 = vsel %vm1787, %v1856, %v1931
          %v1980 = vsel %vm1787, %v1857, %v1933
          %v1982 = vsel %vm1787, %v1858, %v1935
          %v1984 = vsel %vm1787, %v1859, %v1937
          %v1986 = vsel %vm1787, %v1860, %v1939
          %v1988 = vsel %vm1804, %v1972, %v1956
          %v1990 = vsel %vm1804, %v1974, %v1958
          %v1992 = vsel %vm1804, %v1976, %v1960
          %v1994 = vsel %vm1804, %v1978, %v1962
          %v1996 = vsel %vm1804, %v1980, %v1964
          %v1998 = vsel %vm1804, %v1982, %v1966
          %v2000 = vsel %vm1804, %v1984, %v1968
          %v2002 = vsel %vm1804, %v1986, %v1970
          %v2015 = vunpack.c.l.b16 %v406
          %v2016 = vunpack.c.l.b16 %v407
          %v2017 = vunpack.c.l.b16 %v408
          %v2018 = vunpack.c.l.b16 %v409
          %v2019 = vunpack.c.l.b16 %v410
          %v2020 = vunpack.c.l.b16 %v411
          %v2021 = vunpack.c.l.b16 %v412
          %v2022 = vunpack.c.l.b16 %v413
          %v2023 = vunpack.c.l.b16 %v414
          %v2024 = vunpack.c.l.b16 %v415
          %v2025 = vunpack.c.l.b16 %v416
          %v2026 = vunpack.c.l.b16 %v417
          %v2027 = vpack.c.b16 %v2016, %v2015
          %v2028 = vpack.c.b16 %v2018, %v2017
          %v2029 = vpack.c.b16 %v2020, %v2019
          %v2030 = vpack.c.b16 %v2022, %v2021
          %v2031 = vpack.c.b16 %v2024, %v2023
          %v2032 = vpack.c.b16 %v2026, %v2025
          %vm2039 = vcmask 785408
          %v2040 = vsel %vm2039, %v1988, 0
          %v2042 = vsel %vm2039, %v1990, 0
          %v2044 = vsel %vm2039, %v1992, 0
          %v2046 = vsel %vm2039, %v1994, 0
          %v2048 = vsel %vm2039, %v1996, 0
          %v2050 = vsel %vm2039, %v1998, 0
          %v2052 = vsel %vm2039, %v2000, 0
          %v2054 = vsel %vm2039, %v2002, 0
          %2056 = vmatprep.subr.bf16.mxu0 0
          %2057 = vmatpush1.bf16.msra.mxu0 %v2027
          %2058 = vmatprep.subr.bf16.mxu0 0
          %2059 = vmatpush1.bf16.msra.mxu0 %v2028
          %2060 = vmatprep.subr.bf16.mxu0 0
          %2061 = vmatpush1.bf16.msra.mxu0 %v2029
          %2062 = vmatprep.subr.bf16.mxu0 0
          %2063 = vmatpush1.bf16.msra.mxu0 %v2030
          %2064 = vmatprep.subr.bf16.mxu0 0
          %2065 = vmatpush1.bf16.msra.mxu0 %v2031
          %2066 = vmatprep.subr.bf16.mxu0 0
          %2067 = vmatpush1.bf16.msra.mxu0 %v2032
          %2068 = vmatprep.subr.bf16.mxu0 0
          %2069 = vmatpush1.bf16.msra.mxu0 0
          %2070 = vmatprep.subr.bf16.mxu0 0
          %2071 = vmatpush1.bf16.msra.mxu0 0
          %2072 = vmatprep.subr.bf16.mxu0 0
          %2073 = vmatpush1.bf16.msra.mxu0 0
          %2074 = vmatprep.subr.bf16.mxu0 0
          %2075 = vmatpush1.bf16.msra.mxu0 0
          %2076 = vmatprep.subr.bf16.mxu0 0
          %2077 = vmatpush1.bf16.msra.mxu0 0
          %2078 = vmatprep.subr.bf16.mxu0 0
          %2079 = vmatpush1.bf16.msra.mxu0 0
          %2080 = vmatprep.subr.bf16.mxu0 0
          %2081 = vmatpush1.bf16.msra.mxu0 0
          %2082 = vmatprep.subr.bf16.mxu0 0
          %2083 = vmatpush1.bf16.msra.mxu0 0
          %2084 = vmatprep.subr.bf16.mxu0 0
          %2085 = vmatpush1.bf16.msra.mxu0 0
          %2086 = vmatprep.subr.bf16.mxu0 0
          %2087 = vmatpush1.bf16.msra.mxu0 0
          %2088 = vmatprep.mubr.bf16.mxu0 0
          %2089 = vmatmul.mubr.bf16.gmra.mrb[0].mxu0 %v2040
          %v2090 = vpop.f32.mrb[0].mxu0
          %v2091 = vadd.f32 0.0, %v2090
          %v2092 = vpop.f32.mrb[0].mxu0
          %v2093 = vpop.f32.mrb[0].mxu0
          %v2094 = vadd.f32 0.0, %v2093
          %v2095 = vpop.f32.mrb[0].mxu0
          %2096 = vmatprep.mubr.bf16.mxu0 0
          %2097 = vmatmul.mubr.bf16.gmra.mrb[0].mxu0 %v2042
          %v2098 = vpop.f32.mrb[0].mxu0
          %v2099 = vadd.f32 0.0, %v2098
          %v2100 = vpop.f32.mrb[0].mxu0
          %v2101 = vpop.f32.mrb[0].mxu0
          %v2102 = vadd.f32 0.0, %v2101
          %v2103 = vpop.f32.mrb[0].mxu0
          %2104 = vmatprep.mubr.bf16.mxu0 0
          %2105 = vmatmul.mubr.bf16.gmra.mrb[0].mxu0 %v2044
          %v2106 = vpop.f32.mrb[0].mxu0
          %v2107 = vadd.f32 0.0, %v2106
          %v2108 = vpop.f32.mrb[0].mxu0
          %v2109 = vpop.f32.mrb[0].mxu0
          %v2110 = vadd.f32 0.0, %v2109
          %v2111 = vpop.f32.mrb[0].mxu0
          %2112 = vmatprep.mubr.bf16.mxu0 0
          %2113 = vmatmul.mubr.bf16.gmra.mrb[0].mxu0 %v2046
          %v2114 = vpop.f32.mrb[0].mxu0
          %v2115 = vadd.f32 0.0, %v2114
          %v2116 = vpop.f32.mrb[0].mxu0
          %v2117 = vpop.f32.mrb[0].mxu0
          %v2118 = vadd.f32 0.0, %v2117
          %v2119 = vpop.f32.mrb[0].mxu0
          %2120 = vmatprep.mubr.bf16.mxu0 0
          %2121 = vmatmul.mubr.bf16.gmra.mrb[0].mxu0 %v2048
          %v2122 = vpop.f32.mrb[0].mxu0
          %v2123 = vadd.f32 0.0, %v2122
          %v2124 = vpop.f32.mrb[0].mxu0
          %v2125 = vpop.f32.mrb[0].mxu0
          %v2126 = vadd.f32 0.0, %v2125
          %v2127 = vpop.f32.mrb[0].mxu0
          %2128 = vmatprep.mubr.bf16.mxu0 0
          %2129 = vmatmul.mubr.bf16.gmra.mrb[0].mxu0 %v2050
          %v2130 = vpop.f32.mrb[0].mxu0
          %v2131 = vadd.f32 0.0, %v2130
          %v2132 = vpop.f32.mrb[0].mxu0
          %v2133 = vpop.f32.mrb[0].mxu0
          %v2134 = vadd.f32 0.0, %v2133
          %v2135 = vpop.f32.mrb[0].mxu0
          %2136 = vmatprep.mubr.bf16.mxu0 0
          %2137 = vmatmul.mubr.bf16.gmra.mrb[0].mxu0 %v2052
          %v2138 = vpop.f32.mrb[0].mxu0
          %v2139 = vadd.f32 0.0, %v2138
          %v2140 = vpop.f32.mrb[0].mxu0
          %v2141 = vpop.f32.mrb[0].mxu0
          %v2142 = vadd.f32 0.0, %v2141
          %v2143 = vpop.f32.mrb[0].mxu0
          %2144 = vmatprep.mubr.bf16.mxu0 0
          %2145 = vmatmul.mubr.bf16.gmra.mrb[0].mxu0 %v2054
          %v2146 = vpop.f32.mrb[0].mxu0
          %v2147 = vadd.f32 0.0, %v2146
          %v2148 = vpop.f32.mrb[0].mxu0
          %v2149 = vpop.f32.mrb[0].mxu0
          %v2150 = vadd.f32 0.0, %v2149
          %v2151 = vpop.f32.mrb[0].mxu0
          %2152 = vdwg.mxu0
          %v2165 = vunpack.c.l.b16 %v393
          %v2166 = vunpack.c.l.b16 %v394
          %v2167 = vunpack.c.l.b16 %v395
          %v2168 = vunpack.c.l.b16 %v396
          %v2169 = vunpack.c.l.b16 %v397
          %v2170 = vunpack.c.l.b16 %v398
          %v2171 = vunpack.c.l.b16 %v399
          %v2172 = vunpack.c.l.b16 %v400
          %v2173 = vunpack.c.l.b16 %v401
          %v2174 = vunpack.c.l.b16 %v402
          %v2175 = vunpack.c.l.b16 %v403
          %v2176 = vunpack.c.l.b16 %v404
          %v2177 = vpack.c.b16 %v2166, %v2165
          %v2178 = vpack.c.b16 %v2168, %v2167
          %v2179 = vpack.c.b16 %v2170, %v2169
          %v2180 = vpack.c.b16 %v2172, %v2171
          %v2181 = vpack.c.b16 %v2174, %v2173
          %v2182 = vpack.c.b16 %v2176, %v2175
          %v2189 = vsel %vm2039, %v1806, 0
          %v2191 = vsel %vm2039, %v1808, 0
          %v2193 = vsel %vm2039, %v1810, 0
          %v2195 = vsel %vm2039, %v1812, 0
          %v2197 = vsel %vm2039, %v1814, 0
          %v2199 = vsel %vm2039, %v1816, 0
          %v2201 = vsel %vm2039, %v1818, 0
          %v2203 = vsel %vm2039, %v1820, 0
          %2205 = vmatprep.subr.bf16.mxu0 0
          %2206 = vmatpush1.bf16.msra.mxu0 %v2177
          %2207 = vmatprep.subr.bf16.mxu0 0
          %2208 = vmatpush1.bf16.msra.mxu0 %v2178
          %2209 = vmatprep.subr.bf16.mxu0 0
          %2210 = vmatpush1.bf16.msra.mxu0 %v2179
          %2211 = vmatprep.subr.bf16.mxu0 0
          %2212 = vmatpush1.bf16.msra.mxu0 %v2180
          %2213 = vmatprep.subr.bf16.mxu0 0
          %2214 = vmatpush1.bf16.msra.mxu0 %v2181
          %2215 = vmatprep.subr.bf16.mxu0 0
          %2216 = vmatpush1.bf16.msra.mxu0 %v2182
          %2217 = vmatprep.subr.bf16.mxu0 0
          %2218 = vmatpush1.bf16.msra.mxu0 0
          %2219 = vmatprep.subr.bf16.mxu0 0
          %2220 = vmatpush1.bf16.msra.mxu0 0
          %2221 = vmatprep.subr.bf16.mxu0 0
          %2222 = vmatpush1.bf16.msra.mxu0 0
          %2223 = vmatprep.subr.bf16.mxu0 0
          %2224 = vmatpush1.bf16.msra.mxu0 0
          %2225 = vmatprep.subr.bf16.mxu0 0
          %2226 = vmatpush1.bf16.msra.mxu0 0
          %2227 = vmatprep.subr.bf16.mxu0 0
          %2228 = vmatpush1.bf16.msra.mxu0 0
          %2229 = vmatprep.subr.bf16.mxu0 0
          %2230 = vmatpush1.bf16.msra.mxu0 0
          %2231 = vmatprep.subr.bf16.mxu0 0
          %2232 = vmatpush1.bf16.msra.mxu0 0
          %2233 = vmatprep.subr.bf16.mxu0 0
          %2234 = vmatpush1.bf16.msra.mxu0 0
          %2235 = vmatprep.subr.bf16.mxu0 0
          %2236 = vmatpush1.bf16.msra.mxu0 0
          %2237 = vmatprep.mubr.bf16.mxu0 0
          %2238 = vmatmul.mubr.bf16.gmra.mrb[0].mxu0 %v2189
          %v2239 = vpop.f32.mrb[0].mxu0
          %v2240 = vadd.f32 %v2091, %v2239
          %v2241 = vpop.f32.mrb[0].mxu0
          %v2242 = vpop.f32.mrb[0].mxu0
          %v2243 = vadd.f32 %v2094, %v2242
          %v2244 = vpop.f32.mrb[0].mxu0
          %2245 = vmatprep.mubr.bf16.mxu0 0
          %2246 = vmatmul.mubr.bf16.gmra.mrb[0].mxu0 %v2191
          %v2247 = vpop.f32.mrb[0].mxu0
          %v2248 = vadd.f32 %v2099, %v2247
          %v2249 = vpop.f32.mrb[0].mxu0
          %v2250 = vpop.f32.mrb[0].mxu0
          %v2251 = vadd.f32 %v2102, %v2250
          %v2252 = vpop.f32.mrb[0].mxu0
          %2253 = vmatprep.mubr.bf16.mxu0 0
          %2254 = vmatmul.mubr.bf16.gmra.mrb[0].mxu0 %v2193
          %v2255 = vpop.f32.mrb[0].mxu0
          %v2256 = vadd.f32 %v2107, %v2255
          %v2257 = vpop.f32.mrb[0].mxu0
          %v2258 = vpop.f32.mrb[0].mxu0
          %v2259 = vadd.f32 %v2110, %v2258
          %v2260 = vpop.f32.mrb[0].mxu0
          %2261 = vmatprep.mubr.bf16.mxu0 0
          %2262 = vmatmul.mubr.bf16.gmra.mrb[0].mxu0 %v2195
          %v2263 = vpop.f32.mrb[0].mxu0
          %v2264 = vadd.f32 %v2115, %v2263
          %v2265 = vpop.f32.mrb[0].mxu0
          %v2266 = vpop.f32.mrb[0].mxu0
          %v2267 = vadd.f32 %v2118, %v2266
          %v2268 = vpop.f32.mrb[0].mxu0
          %2269 = vmatprep.mubr.bf16.mxu0 0
          %2270 = vmatmul.mubr.bf16.gmra.mrb[0].mxu0 %v2197
          %v2271 = vpop.f32.mrb[0].mxu0
          %v2272 = vadd.f32 %v2123, %v2271
          %v2273 = vpop.f32.mrb[0].mxu0
          %v2274 = vpop.f32.mrb[0].mxu0
          %v2275 = vadd.f32 %v2126, %v2274
          %v2276 = vpop.f32.mrb[0].mxu0
          %2277 = vmatprep.mubr.bf16.mxu0 0
          %2278 = vmatmul.mubr.bf16.gmra.mrb[0].mxu0 %v2199
          %v2279 = vpop.f32.mrb[0].mxu0
          %v2280 = vadd.f32 %v2131, %v2279
          %v2281 = vpop.f32.mrb[0].mxu0
          %v2282 = vpop.f32.mrb[0].mxu0
          %v2283 = vadd.f32 %v2134, %v2282
          %v2284 = vpop.f32.mrb[0].mxu0
          %2285 = vmatprep.mubr.bf16.mxu0 0
          %2286 = vmatmul.mubr.bf16.gmra.mrb[0].mxu0 %v2201
          %v2287 = vpop.f32.mrb[0].mxu0
          %v2288 = vadd.f32 %v2139, %v2287
          %v2289 = vpop.f32.mrb[0].mxu0
          %v2290 = vpop.f32.mrb[0].mxu0
          %v2291 = vadd.f32 %v2142, %v2290
          %v2292 = vpop.f32.mrb[0].mxu0
          %2293 = vmatprep.mubr.bf16.mxu0 0
          %2294 = vmatmul.mubr.bf16.gmra.mrb[0].mxu0 %v2203
          %v2295 = vpop.f32.mrb[0].mxu0
          %v2296 = vadd.f32 %v2147, %v2295
          %v2297 = vpop.f32.mrb[0].mxu0
          %v2298 = vpop.f32.mrb[0].mxu0
          %v2299 = vadd.f32 %v2150, %v2298
          %v2300 = vpop.f32.mrb[0].mxu0
          %2301 = vdwg.mxu0
          %v2318 = vunpack.c.l.b16 %v1619
          %v2319 = vunpack.c.l.b16 %v1620
          %v2320 = vunpack.c.l.b16 %v1621
          %v2321 = vunpack.c.l.b16 %v1622
          %v2322 = vunpack.c.l.b16 %v1623
          %v2323 = vunpack.c.l.b16 %v1624
          %v2324 = vunpack.c.l.b16 %v1625
          %v2325 = vunpack.c.l.b16 %v1626
          %v2326 = vunpack.c.l.b16 %v1627
          %v2327 = vunpack.c.l.b16 %v1628
          %v2328 = vunpack.c.l.b16 %v1629
          %v2329 = vunpack.c.l.b16 %v1630
          %v2330 = vunpack.c.l.b16 %v1631
          %v2331 = vunpack.c.l.b16 %v1632
          %v2332 = vunpack.c.l.b16 %v1633
          %v2333 = vunpack.c.l.b16 %v1634
          %v2334 = vpack.c.b16 %v2319, %v2318
          %v2335 = vpack.c.b16 %v2321, %v2320
          %v2336 = vpack.c.b16 %v2323, %v2322
          %v2337 = vpack.c.b16 %v2325, %v2324
          %v2338 = vpack.c.b16 %v2327, %v2326
          %v2339 = vpack.c.b16 %v2329, %v2328
          %v2340 = vpack.c.b16 %v2331, %v2330
          %v2341 = vpack.c.b16 %v2333, %v2332
          %v2343 = vshrl.u32 %v2334, 16
          %v2345 = vshll.u32 %v2334, 16
          %v2347 = vrot.slane %v2345, 1
          %v2348 = vor.u32 %v2343, %v2347
          %v2350 = vshll.u32 %v2335, 16
          %v2352 = vrot.slane %v2350, 1
          %v2353 = vsel %vm1675, %v2348, %v2352
          %v2354 = vshrl.u32 %v2335, 16
          %v2356 = vor.u32 %v2354, %v2352
          %v2358 = vshll.u32 %v2336, 16
          %v2360 = vrot.slane %v2358, 1
          %v2361 = vsel %vm1675, %v2356, %v2360
          %v2362 = vshrl.u32 %v2336, 16
          %v2364 = vor.u32 %v2362, %v2360
          %v2366 = vshll.u32 %v2337, 16
          %v2368 = vrot.slane %v2366, 1
          %v2369 = vsel %vm1675, %v2364, %v2368
          %v2370 = vshrl.u32 %v2337, 16
          %v2372 = vor.u32 %v2370, %v2368
          %v2374 = vshll.u32 %v2338, 16
          %v2376 = vrot.slane %v2374, 1
          %v2377 = vsel %vm1675, %v2372, %v2376
          %v2378 = vshrl.u32 %v2338, 16
          %v2380 = vor.u32 %v2378, %v2376
          %v2382 = vshll.u32 %v2339, 16
          %v2384 = vrot.slane %v2382, 1
          %v2385 = vsel %vm1675, %v2380, %v2384
          %v2386 = vshrl.u32 %v2339, 16
          %v2388 = vor.u32 %v2386, %v2384
          %v2390 = vshll.u32 %v2340, 16
          %v2392 = vrot.slane %v2390, 1
          %v2393 = vsel %vm1675, %v2388, %v2392
          %v2394 = vshrl.u32 %v2340, 16
          %v2396 = vor.u32 %v2394, %v2392
          %v2398 = vshll.u32 %v2341, 16
          %v2400 = vrot.slane %v2398, 1
          %v2401 = vsel %vm1675, %v2396, %v2400
          %v2402 = vshrl.u32 %v2341, 16
          %v2404 = vor.u32 %v2402, %v2400
          %2405 = vrot.lane.b32.xlu0 %v2353, 32
          %v2406 = vpop.permute.xlu0 %2405
          %2407 = vrot.lane.b32.xlu0 %v2361, 32
          %v2408 = vpop.permute.xlu0 %2407
          %2409 = vrot.lane.b32.xlu0 %v2369, 32
          %v2410 = vpop.permute.xlu0 %2409
          %2411 = vrot.lane.b32.xlu0 %v2377, 32
          %v2412 = vpop.permute.xlu0 %2411
          %2413 = vrot.lane.b32.xlu0 %v2385, 32
          %v2414 = vpop.permute.xlu0 %2413
          %2415 = vrot.lane.b32.xlu0 %v2393, 32
          %v2416 = vpop.permute.xlu0 %2415
          %2417 = vrot.lane.b32.xlu0 %v2401, 32
          %v2418 = vpop.permute.xlu0 %2417
          %2419 = vrot.lane.b32.xlu0 %v2404, 32
          %v2420 = vpop.permute.xlu0 %2419
          %v2421 = vrot.slane %v2334, 1
          %v2422 = vrot.slane %v2335, 1
          %v2423 = vsel %vm1755, %v2421, %v2422
          %v2424 = vrot.slane %v2336, 1
          %v2425 = vsel %vm1755, %v2422, %v2424
          %v2426 = vrot.slane %v2337, 1
          %v2427 = vsel %vm1755, %v2424, %v2426
          %v2428 = vrot.slane %v2338, 1
          %v2429 = vsel %vm1755, %v2426, %v2428
          %v2430 = vrot.slane %v2339, 1
          %v2431 = vsel %vm1755, %v2428, %v2430
          %v2432 = vrot.slane %v2340, 1
          %v2433 = vsel %vm1755, %v2430, %v2432
          %v2434 = vrot.slane %v2341, 1
          %v2435 = vsel %vm1755, %v2432, %v2434
          %2436 = vrot.lane.b32.xlu0 %v2423, 64
          %v2437 = vpop.permute.xlu0 %2436
          %2438 = vrot.lane.b32.xlu0 %v2425, 64
          %v2439 = vpop.permute.xlu0 %2438
          %2440 = vrot.lane.b32.xlu0 %v2427, 64
          %v2441 = vpop.permute.xlu0 %2440
          %2442 = vrot.lane.b32.xlu0 %v2429, 64
          %v2443 = vpop.permute.xlu0 %2442
          %2444 = vrot.lane.b32.xlu0 %v2431, 64
          %v2445 = vpop.permute.xlu0 %2444
          %2446 = vrot.lane.b32.xlu0 %v2433, 64
          %v2447 = vpop.permute.xlu0 %2446
          %2448 = vrot.lane.b32.xlu0 %v2435, 64
          %v2449 = vpop.permute.xlu0 %2448
          %2450 = vrot.lane.b32.xlu0 %v2434, 64
          %v2451 = vpop.permute.xlu0 %2450
          %v2453 = vsel %vm1787, %v2334, %v2406
          %v2455 = vsel %vm1787, %v2335, %v2408
          %v2457 = vsel %vm1787, %v2336, %v2410
          %v2459 = vsel %vm1787, %v2337, %v2412
          %v2461 = vsel %vm1787, %v2338, %v2414
          %v2463 = vsel %vm1787, %v2339, %v2416
          %v2465 = vsel %vm1787, %v2340, %v2418
          %v2467 = vsel %vm1787, %v2341, %v2420
          %v2469 = vsel %vm1804, %v2453, %v2437
          %v2471 = vsel %vm1804, %v2455, %v2439
          %v2473 = vsel %vm1804, %v2457, %v2441
          %v2475 = vsel %vm1804, %v2459, %v2443
          %v2477 = vsel %vm1804, %v2461, %v2445
          %v2479 = vsel %vm1804, %v2463, %v2447
          %v2481 = vsel %vm1804, %v2465, %v2449
          %v2483 = vsel %vm1804, %v2467, %v2451
          %v2496 = vunpack.c.l.b16 %v419
          %v2497 = vunpack.c.l.b16 %v420
          %v2498 = vunpack.c.l.b16 %v421
          %v2499 = vunpack.c.l.b16 %v422
          %v2500 = vunpack.c.l.b16 %v423
          %v2501 = vunpack.c.l.b16 %v424
          %v2502 = vunpack.c.l.b16 %v425
          %v2503 = vunpack.c.l.b16 %v426
          %v2504 = vunpack.c.l.b16 %v427
          %v2505 = vunpack.c.l.b16 %v428
          %v2506 = vunpack.c.l.b16 %v429
          %v2507 = vunpack.c.l.b16 %v430
          %v2508 = vpack.c.b16 %v2497, %v2496
          %v2509 = vpack.c.b16 %v2499, %v2498
          %v2510 = vpack.c.b16 %v2501, %v2500
          %v2511 = vpack.c.b16 %v2503, %v2502
          %v2512 = vpack.c.b16 %v2505, %v2504
          %v2513 = vpack.c.b16 %v2507, %v2506
          %v2520 = vsel %vm2039, %v2469, 0
          %v2522 = vsel %vm2039, %v2471, 0
          %v2524 = vsel %vm2039, %v2473, 0
          %v2526 = vsel %vm2039, %v2475, 0
          %v2528 = vsel %vm2039, %v2477, 0
          %v2530 = vsel %vm2039, %v2479, 0
          %v2532 = vsel %vm2039, %v2481, 0
          %v2534 = vsel %vm2039, %v2483, 0
          %2536 = vmatprep.subr.bf16.mxu0 0
          %2537 = vmatpush1.bf16.msra.mxu0 %v2508
          %2538 = vmatprep.subr.bf16.mxu0 0
          %2539 = vmatpush1.bf16.msra.mxu0 %v2509
          %2540 = vmatprep.subr.bf16.mxu0 0
          %2541 = vmatpush1.bf16.msra.mxu0 %v2510
          %2542 = vmatprep.subr.bf16.mxu0 0
          %2543 = vmatpush1.bf16.msra.mxu0 %v2511
          %2544 = vmatprep.subr.bf16.mxu0 0
          %2545 = vmatpush1.bf16.msra.mxu0 %v2512
          %2546 = vmatprep.subr.bf16.mxu0 0
          %2547 = vmatpush1.bf16.msra.mxu0 %v2513
          %2548 = vmatprep.subr.bf16.mxu0 0
          %2549 = vmatpush1.bf16.msra.mxu0 0
          %2550 = vmatprep.subr.bf16.mxu0 0
          %2551 = vmatpush1.bf16.msra.mxu0 0
          %2552 = vmatprep.subr.bf16.mxu0 0
          %2553 = vmatpush1.bf16.msra.mxu0 0
          %2554 = vmatprep.subr.bf16.mxu0 0
          %2555 = vmatpush1.bf16.msra.mxu0 0
          %2556 = vmatprep.subr.bf16.mxu0 0
          %2557 = vmatpush1.bf16.msra.mxu0 0
          %2558 = vmatprep.subr.bf16.mxu0 0
          %2559 = vmatpush1.bf16.msra.mxu0 0
          %2560 = vmatprep.subr.bf16.mxu0 0
          %2561 = vmatpush1.bf16.msra.mxu0 0
          %2562 = vmatprep.subr.bf16.mxu0 0
          %2563 = vmatpush1.bf16.msra.mxu0 0
          %2564 = vmatprep.subr.bf16.mxu0 0
          %2565 = vmatpush1.bf16.msra.mxu0 0
          %2566 = vmatprep.subr.bf16.mxu0 0
          %2567 = vmatpush1.bf16.msra.mxu0 0
          %2568 = vmatprep.mubr.bf16.mxu0 0
          %2569 = vmatmul.mubr.bf16.gmra.mrb[0].mxu0 %v2520
          %v2570 = vpop.f32.mrb[0].mxu0
          %v2571 = vadd.f32 0.0, %v2570
          %v2572 = vpop.f32.mrb[0].mxu0
          %v2573 = vpop.f32.mrb[0].mxu0
          %v2574 = vadd.f32 0.0, %v2573
          %v2575 = vpop.f32.mrb[0].mxu0
          %2576 = vmatprep.mubr.bf16.mxu0 0
          %2577 = vmatmul.mubr.bf16.gmra.mrb[0].mxu0 %v2522
          %v2578 = vpop.f32.mrb[0].mxu0
          %v2579 = vadd.f32 0.0, %v2578
          %v2580 = vpop.f32.mrb[0].mxu0
          %v2581 = vpop.f32.mrb[0].mxu0
          %v2582 = vadd.f32 0.0, %v2581
          %v2583 = vpop.f32.mrb[0].mxu0
          %2584 = vmatprep.mubr.bf16.mxu0 0
          %2585 = vmatmul.mubr.bf16.gmra.mrb[0].mxu0 %v2524
          %v2586 = vpop.f32.mrb[0].mxu0
          %v2587 = vadd.f32 0.0, %v2586
          %v2588 = vpop.f32.mrb[0].mxu0
          %v2589 = vpop.f32.mrb[0].mxu0
          %v2590 = vadd.f32 0.0, %v2589
          %v2591 = vpop.f32.mrb[0].mxu0
          %2592 = vmatprep.mubr.bf16.mxu0 0
          %2593 = vmatmul.mubr.bf16.gmra.mrb[0].mxu0 %v2526
          %v2594 = vpop.f32.mrb[0].mxu0
          %v2595 = vadd.f32 0.0, %v2594
          %v2596 = vpop.f32.mrb[0].mxu0
          %v2597 = vpop.f32.mrb[0].mxu0
          %v2598 = vadd.f32 0.0, %v2597
          %v2599 = vpop.f32.mrb[0].mxu0
          %2600 = vmatprep.mubr.bf16.mxu0 0
          %2601 = vmatmul.mubr.bf16.gmra.mrb[0].mxu0 %v2528
          %v2602 = vpop.f32.mrb[0].mxu0
          %v2603 = vadd.f32 0.0, %v2602
          %v2604 = vpop.f32.mrb[0].mxu0
          %v2605 = vpop.f32.mrb[0].mxu0
          %v2606 = vadd.f32 0.0, %v2605
          %v2607 = vpop.f32.mrb[0].mxu0
          %2608 = vmatprep.mubr.bf16.mxu0 0
          %2609 = vmatmul.mubr.bf16.gmra.mrb[0].mxu0 %v2530
          %v2610 = vpop.f32.mrb[0].mxu0
          %v2611 = vadd.f32 0.0, %v2610
          %v2612 = vpop.f32.mrb[0].mxu0
          %v2613 = vpop.f32.mrb[0].mxu0
          %v2614 = vadd.f32 0.0, %v2613
          %v2615 = vpop.f32.mrb[0].mxu0
          %2616 = vmatprep.mubr.bf16.mxu0 0
          %2617 = vmatmul.mubr.bf16.gmra.mrb[0].mxu0 %v2532
          %v2618 = vpop.f32.mrb[0].mxu0
          %v2619 = vadd.f32 0.0, %v2618
          %v2620 = vpop.f32.mrb[0].mxu0
          %v2621 = vpop.f32.mrb[0].mxu0
          %v2622 = vadd.f32 0.0, %v2621
          %v2623 = vpop.f32.mrb[0].mxu0
          %2624 = vmatprep.mubr.bf16.mxu0 0
          %2625 = vmatmul.mubr.bf16.gmra.mrb[0].mxu0 %v2534
          %v2626 = vpop.f32.mrb[0].mxu0
          %v2627 = vadd.f32 0.0, %v2626
          %v2628 = vpop.f32.mrb[0].mxu0
          %v2629 = vpop.f32.mrb[0].mxu0
          %v2630 = vadd.f32 0.0, %v2629
          %v2631 = vpop.f32.mrb[0].mxu0
          %2632 = vdwg.mxu0
          %v2633 = vadd.f32 %v2240, %v2571
          %v2634 = vadd.f32 %v2243, %v2574
          %v2635 = vadd.f32 %v2248, %v2579
          %v2636 = vadd.f32 %v2251, %v2582
          %v2637 = vadd.f32 %v2256, %v2587
          %v2638 = vadd.f32 %v2259, %v2590
          %v2639 = vadd.f32 %v2264, %v2595
          %v2640 = vadd.f32 %v2267, %v2598
          %v2641 = vadd.f32 %v2272, %v2603
          %v2642 = vadd.f32 %v2275, %v2606
          %v2643 = vadd.f32 %v2280, %v2611
          %v2644 = vadd.f32 %v2283, %v2614
          %v2645 = vadd.f32 %v2288, %v2619
          %v2646 = vadd.f32 %v2291, %v2622
          %v2647 = vadd.f32 %v2296, %v2627
          %v2648 = vadd.f32 %v2299, %v2630
          %v2650 = vlaneseq
          %v2651 = vshrl.u32 %v2650, 7
          %v2652 = vsub.s32 0, %v2651
          %v2653 = vrot.slane %v432, %v2652
          %v2655 = vadd.f32 %v2633, %v2653
          %v2656 = vadd.f32 %v2634, %v2653
          %v2657 = vadd.f32 %v2635, %v2653
          %v2658 = vadd.f32 %v2636, %v2653
          %v2659 = vadd.f32 %v2637, %v2653
          %v2660 = vadd.f32 %v2638, %v2653
          %v2661 = vadd.f32 %v2639, %v2653
          %v2662 = vadd.f32 %v2640, %v2653
          %v2663 = vadd.f32 %v2641, %v2653
          %v2664 = vadd.f32 %v2642, %v2653
          %v2665 = vadd.f32 %v2643, %v2653
          %v2666 = vadd.f32 %v2644, %v2653
          %v2667 = vadd.f32 %v2645, %v2653
          %v2668 = vadd.f32 %v2646, %v2653
          %v2669 = vadd.f32 %v2647, %v2653
          %v2670 = vadd.f32 %v2648, %v2653
          %v2671 = vmax.f32 %v2655, 0.0
          %v2672 = vmax.f32 %v2656, 0.0
          %v2673 = vmax.f32 %v2657, 0.0
          %v2674 = vmax.f32 %v2658, 0.0
          %v2675 = vmax.f32 %v2659, 0.0
          %v2676 = vmax.f32 %v2660, 0.0
          %v2677 = vmax.f32 %v2661, 0.0
          %v2678 = vmax.f32 %v2662, 0.0
          %v2679 = vmax.f32 %v2663, 0.0
          %v2680 = vmax.f32 %v2664, 0.0
          %v2681 = vmax.f32 %v2665, 0.0
          %v2682 = vmax.f32 %v2666, 0.0
          %v2683 = vmax.f32 %v2667, 0.0
          %v2684 = vmax.f32 %v2668, 0.0
          %v2685 = vmax.f32 %v2669, 0.0
          %v2686 = vmax.f32 %v2670, 0.0
          %v2687 = vadd.f32 %v1560, %v2671
          %v2688 = vadd.f32 %v1561, %v2672
          %v2689 = vadd.f32 %v1562, %v2673
          %v2690 = vadd.f32 %v1563, %v2674
          %v2691 = vadd.f32 %v1564, %v2675
          %v2692 = vadd.f32 %v1565, %v2676
          %v2693 = vadd.f32 %v1566, %v2677
          %v2694 = vadd.f32 %v1567, %v2678
          %v2695 = vadd.f32 %v1568, %v2679
          %v2696 = vadd.f32 %v1569, %v2680
          %v2697 = vadd.f32 %v1570, %v2681
          %v2698 = vadd.f32 %v1571, %v2682
          %v2699 = vadd.f32 %v1572, %v2683
          %v2700 = vadd.f32 %v1573, %v2684
          %v2701 = vadd.f32 %v1574, %v2685
          %v2702 = vadd.f32 %v1575, %v2686
        $region76: #{network_forward.1} parent=63 // loop_footer
          %s1559 = sadd.s32 1, %s1555
        $region77: #{network_forward.1} parent=63 // loop_footer_branch
          %1554 = sbr.rel target = $region73
        $region78: #{network_forward.1} parent=63 // loop_exit
          _
        %vm2703 = vcmask 523264
        %v2704 = vsel %vm2703, %v1560, 0.0
        %v2705 = vsel %vm2703, %v1561, 0.0
        %v2706 = vadd.f32 %v2704, %v2705
        %v2707 = vsel %vm2703, %v1562, 0.0
        %v2708 = vadd.f32 %v2706, %v2707
        %v2709 = vsel %vm2703, %v1563, 0.0
        %v2710 = vadd.f32 %v2708, %v2709
        %v2711 = vsel %vm2703, %v1564, 0.0
        %v2712 = vadd.f32 %v2710, %v2711
        %v2713 = vsel %vm2703, %v1565, 0.0
        %v2714 = vadd.f32 %v2712, %v2713
        %v2715 = vsel %vm2703, %v1566, 0.0
        %v2716 = vadd.f32 %v2714, %v2715
        %v2717 = vsel %vm2703, %v1567, 0.0
        %v2718 = vadd.f32 %v2716, %v2717
        %v2719 = vsel %vm2703, %v1568, 0.0
        %v2720 = vadd.f32 %v2718, %v2719
        %v2721 = vsel %vm2703, %v1569, 0.0
        %v2722 = vadd.f32 %v2720, %v2721
        %v2723 = vsel %vm2703, %v1570, 0.0
        %v2724 = vadd.f32 %v2722, %v2723
        %v2725 = vsel %vm2703, %v1571, 0.0
        %v2726 = vadd.f32 %v2724, %v2725
        %v2727 = vsel %vm2703, %v1572, 0.0
        %v2728 = vadd.f32 %v2726, %v2727
        %v2729 = vsel %vm2703, %v1573, 0.0
        %v2730 = vadd.f32 %v2728, %v2729
        %v2731 = vsel %vm2703, %v1574, 0.0
        %v2732 = vadd.f32 %v2730, %v2731
        %vm2733 = vcmask 519168
        %v2734 = vsel %vm2733, %v1575, 0.0
        %v2735 = vadd.f32 %v2732, %v2734
        %v2736 = vrot.slane %v2735, 4
        %v2737 = vadd.f32 %v2735, %v2736
        %v2738 = vrot.slane %v2737, 2
        %v2739 = vadd.f32 %v2737, %v2738
        %v2740 = vrot.slane %v2739, 1
        %v2741 = vadd.f32 %v2739, %v2740
        %v2742 = vmul.f32 %v2741, 6.503642e-05
        %v2743 = vld [vmem:[%s5] sm:$0xff]
        %v2744 = vld [vmem:[%s5 + $0x8] sm:$0xff]
        %v2745 = vld [vmem:[%s5 + $0x10] sm:$0xff]
        %v2746 = vld [vmem:[%s5 + $0x18] sm:$0xff]
        %v2747 = vld [vmem:[%s5 + $0x20] sm:$0xff]
        %v2748 = vld [vmem:[%s5 + $0x28] sm:$0xff]
        %v2749 = vld [vmem:[%s5 + $0x30] sm:$0xff]
        %v2750 = vld [vmem:[%s5 + $0x38] sm:$0xff]
        %v2751 = vld [vmem:[%s6] sm:$0x1]
        %v2753 = vsel %vm2703, %v2742, 0
        %2755 = vmatprep.subr.mxu0 0.0
        %2756 = vmatpush1.msra.mxu0 %v2743
        %2757 = vmatprep.subr.mxu0 0.0
        %2758 = vmatpush1.msra.mxu0 %v2744
        %2759 = vmatprep.subr.mxu0 0.0
        %2760 = vmatpush1.msra.mxu0 %v2745
        %2761 = vmatprep.subr.mxu0 0.0
        %2762 = vmatpush1.msra.mxu0 %v2746
        %2763 = vmatprep.subr.mxu0 0.0
        %2764 = vmatpush1.msra.mxu0 %v2747
        %2765 = vmatprep.subr.mxu0 0.0
        %2766 = vmatpush1.msra.mxu0 %v2748
        %2767 = vmatprep.subr.mxu0 0.0
        %2768 = vmatpush1.msra.mxu0 %v2749
        %2769 = vmatprep.subr.mxu0 0.0
        %2770 = vmatpush1.msra.mxu0 %v2750
        %2771 = vmatprep.subr.mxu0 0.0
        %2772 = vmatpush1.msra.mxu0 0.0
        %2773 = vmatprep.subr.mxu0 0.0
        %2774 = vmatpush1.msra.mxu0 0.0
        %2775 = vmatprep.subr.mxu0 0.0
        %2776 = vmatpush1.msra.mxu0 0.0
        %2777 = vmatprep.subr.mxu0 0.0
        %2778 = vmatpush1.msra.mxu0 0.0
        %2779 = vmatprep.subr.mxu0 0.0
        %2780 = vmatpush1.msra.mxu0 0.0
        %2781 = vmatprep.subr.mxu0 0.0
        %2782 = vmatpush1.msra.mxu0 0.0
        %2783 = vmatprep.subr.mxu0 0.0
        %2784 = vmatpush1.msra.mxu0 0.0
        %2785 = vmatprep.subr.mxu0 0.0
        %2786 = vmatpush1.msra.mxu0 0.0
        %2787 = vmatprep.subr.mxu0 0.0
        %2788 = vmatpush1.msra.mxu0 0.0
        %2789 = vmatprep.subr.mxu0 0.0
        %2790 = vmatpush1.msra.mxu0 0.0
        %2791 = vmatprep.subr.mxu0 0.0
        %2792 = vmatpush1.msra.mxu0 0.0
        %2793 = vmatprep.subr.mxu0 0.0
        %2794 = vmatpush1.msra.mxu0 0.0
        %2795 = vmatprep.subr.mxu0 0.0
        %2796 = vmatpush1.msra.mxu0 0.0
        %2797 = vmatprep.subr.mxu0 0.0
        %2798 = vmatpush1.msra.mxu0 0.0
        %2799 = vmatprep.subr.mxu0 0.0
        %2800 = vmatpush1.msra.mxu0 0.0
        %2801 = vmatprep.subr.mxu0 0.0
        %2802 = vmatpush1.msra.mxu0 0.0
        %2803 = vmatprep.subr.mxu0 0.0
        %2804 = vmatpush1.msra.mxu0 0.0
        %2805 = vmatprep.subr.mxu0 0.0
        %2806 = vmatpush1.msra.mxu0 0.0
        %2807 = vmatprep.subr.mxu0 0.0
        %2808 = vmatpush1.msra.mxu0 0.0
        %2809 = vmatprep.subr.mxu0 0.0
        %2810 = vmatpush1.msra.mxu0 0.0
        %2811 = vmatprep.subr.mxu0 0.0
        %2812 = vmatpush1.msra.mxu0 0.0
        %2813 = vmatprep.subr.mxu0 0.0
        %2814 = vmatpush1.msra.mxu0 0.0
        %2815 = vmatprep.subr.mxu0 0.0
        %2816 = vmatpush1.msra.mxu0 0.0
        %2817 = vmatprep.subr.mxu0 0.0
        %2818 = vmatpush1.msra.mxu0 0.0
        %2819 = vmatprep.mubr.f32.mxu0 0.0
        %2820 = vmatmul.mubr.f32.gmra.mrb[0].mxu0 %v2753
        %v2821 = vpop.f32.mrb[0].mxu0
        %v2822 = vadd.f32 %v2751, %v2821
        %v2823 = vpop.f32.mrb[0].mxu0
        %2824 = vdwg.mxu0
        %v2825 = vmax.f32 %v2822, 0.0
        %v2826 = vld [vmem:[%s7] sm:$0xff]
        %v2827 = vld [vmem:[%s7 + $0x8] sm:$0xff]
        %v2828 = vld [vmem:[%s7 + $0x10] sm:$0xff]
        %v2829 = vld [vmem:[%s7 + $0x18] sm:$0xff]
        %v2830 = vld [vmem:[%s7 + $0x20] sm:$0xff]
        %v2831 = vld [vmem:[%s7 + $0x28] sm:$0xff]
        %v2832 = vld [vmem:[%s7 + $0x30] sm:$0xff]
        %v2833 = vld [vmem:[%s7 + $0x38] sm:$0xff]
        %v2834 = vld [vmem:[%s7 + $0x40] sm:$0xff]
        %v2835 = vld [vmem:[%s7 + $0x48] sm:$0xff]
        %v2836 = vld [vmem:[%s7 + $0x50] sm:$0xff]
        %v2837 = vld [vmem:[%s7 + $0x58] sm:$0xff]
        %v2838 = vld [vmem:[%s7 + $0x60] sm:$0xff]
        %v2839 = vld [vmem:[%s7 + $0x68] sm:$0xff]
        %v2840 = vld [vmem:[%s7 + $0x70] sm:$0xff]
        %v2841 = vld [vmem:[%s7 + $0x78] sm:$0xff]
        %v2842 = vld [vmem:[%s8] sm:$0x1]
        %2843 = vmatprep.subr.mxu0 0.0
        %2844 = vmatpush1.msra.mxu0 %v2826
        %2845 = vmatprep.subr.mxu0 0.0
        %2846 = vmatpush1.msra.mxu0 %v2827
        %2847 = vmatprep.subr.mxu0 0.0
        %2848 = vmatpush1.msra.mxu0 %v2828
        %2849 = vmatprep.subr.mxu0 0.0
        %2850 = vmatpush1.msra.mxu0 %v2829
        %2851 = vmatprep.subr.mxu0 0.0
        %2852 = vmatpush1.msra.mxu0 %v2830
        %2853 = vmatprep.subr.mxu0 0.0
        %2854 = vmatpush1.msra.mxu0 %v2831
        %2855 = vmatprep.subr.mxu0 0.0
        %2856 = vmatpush1.msra.mxu0 %v2832
        %2857 = vmatprep.subr.mxu0 0.0
        %2858 = vmatpush1.msra.mxu0 %v2833
        %2859 = vmatprep.subr.mxu0 0.0
        %2860 = vmatpush1.msra.mxu0 %v2834
        %2861 = vmatprep.subr.mxu0 0.0
        %2862 = vmatpush1.msra.mxu0 %v2835
        %2863 = vmatprep.subr.mxu0 0.0
        %2864 = vmatpush1.msra.mxu0 %v2836
        %2865 = vmatprep.subr.mxu0 0.0
        %2866 = vmatpush1.msra.mxu0 %v2837
        %2867 = vmatprep.subr.mxu0 0.0
        %2868 = vmatpush1.msra.mxu0 %v2838
        %2869 = vmatprep.subr.mxu0 0.0
        %2870 = vmatpush1.msra.mxu0 %v2839
        %2871 = vmatprep.subr.mxu0 0.0
        %2872 = vmatpush1.msra.mxu0 %v2840
        %2873 = vmatprep.subr.mxu0 0.0
        %2874 = vmatpush1.msra.mxu0 %v2841
        %2875 = vmatprep.subr.mxu0 0.0
        %2876 = vmatpush1.msra.mxu0 0.0
        %2877 = vmatprep.subr.mxu0 0.0
        %2878 = vmatpush1.msra.mxu0 0.0
        %2879 = vmatprep.subr.mxu0 0.0
        %2880 = vmatpush1.msra.mxu0 0.0
        %2881 = vmatprep.subr.mxu0 0.0
        %2882 = vmatpush1.msra.mxu0 0.0
        %2883 = vmatprep.subr.mxu0 0.0
        %2884 = vmatpush1.msra.mxu0 0.0
        %2885 = vmatprep.subr.mxu0 0.0
        %2886 = vmatpush1.msra.mxu0 0.0
        %2887 = vmatprep.subr.mxu0 0.0
        %2888 = vmatpush1.msra.mxu0 0.0
        %2889 = vmatprep.subr.mxu0 0.0
        %2890 = vmatpush1.msra.mxu0 0.0
        %2891 = vmatprep.subr.mxu0 0.0
        %2892 = vmatpush1.msra.mxu0 0.0
        %2893 = vmatprep.subr.mxu0 0.0
        %2894 = vmatpush1.msra.mxu0 0.0
        %2895 = vmatprep.subr.mxu0 0.0
        %2896 = vmatpush1.msra.mxu0 0.0
        %2897 = vmatprep.subr.mxu0 0.0
        %2898 = vmatpush1.msra.mxu0 0.0
        %2899 = vmatprep.subr.mxu0 0.0
        %2900 = vmatpush1.msra.mxu0 0.0
        %2901 = vmatprep.subr.mxu0 0.0
        %2902 = vmatpush1.msra.mxu0 0.0
        %2903 = vmatprep.subr.mxu0 0.0
        %2904 = vmatpush1.msra.mxu0 0.0
        %2905 = vmatprep.subr.mxu0 0.0
        %2906 = vmatpush1.msra.mxu0 0.0
        %2907 = vmatprep.mubr.f32.mxu0 0.0
        %2908 = vmatmul.mubr.f32.gmra.mrb[0].mxu0 %v2825
        %v2909 = vpop.f32.mrb[0].mxu0
        %v2910 = vadd.f32 %v2842, %v2909
        %v2911 = vpop.f32.mrb[0].mxu0
        %2912 = vdwg.mxu0
        %v2913 = vmax.f32 %v2910, 0.0
        %v2914 = vld [vmem:[%s9] sm:$0xff]
        %v2915 = vld [vmem:[%s9 + $0x8] sm:$0xff]
        %v2916 = vld [vmem:[%s9 + $0x10] sm:$0xff]
        %v2917 = vld [vmem:[%s9 + $0x18] sm:$0xff]
        %v2918 = vld [vmem:[%s9 + $0x20] sm:$0xff]
        %v2919 = vld [vmem:[%s9 + $0x28] sm:$0xff]
        %v2920 = vld [vmem:[%s9 + $0x30] sm:$0xff]
        %v2921 = vld [vmem:[%s9 + $0x38] sm:$0xff]
        %v2922 = vld [vmem:[%s9 + $0x40] sm:$0xff]
        %v2923 = vld [vmem:[%s9 + $0x48] sm:$0xff]
        %v2924 = vld [vmem:[%s9 + $0x50] sm:$0xff]
        %v2925 = vld [vmem:[%s9 + $0x58] sm:$0xff]
        %v2926 = vld [vmem:[%s9 + $0x60] sm:$0xff]
        %v2927 = vld [vmem:[%s9 + $0x68] sm:$0xff]
        %v2928 = vld [vmem:[%s9 + $0x70] sm:$0xff]
        %v2929 = vld [vmem:[%s9 + $0x78] sm:$0xff]
        %v2930 = vld [vmem:[%s10] sm:$0x1]
        %2931 = vmatprep.subr.mxu0 0.0
        %2932 = vmatpush1.msra.mxu0 %v2914
        %2933 = vmatprep.subr.mxu0 0.0
        %2934 = vmatpush1.msra.mxu0 %v2915
        %2935 = vmatprep.subr.mxu0 0.0
        %2936 = vmatpush1.msra.mxu0 %v2916
        %2937 = vmatprep.subr.mxu0 0.0
        %2938 = vmatpush1.msra.mxu0 %v2917
        %2939 = vmatprep.subr.mxu0 0.0
        %2940 = vmatpush1.msra.mxu0 %v2918
        %2941 = vmatprep.subr.mxu0 0.0
        %2942 = vmatpush1.msra.mxu0 %v2919
        %2943 = vmatprep.subr.mxu0 0.0
        %2944 = vmatpush1.msra.mxu0 %v2920
        %2945 = vmatprep.subr.mxu0 0.0
        %2946 = vmatpush1.msra.mxu0 %v2921
        %2947 = vmatprep.subr.mxu0 0.0
        %2948 = vmatpush1.msra.mxu0 %v2922
        %2949 = vmatprep.subr.mxu0 0.0
        %2950 = vmatpush1.msra.mxu0 %v2923
        %2951 = vmatprep.subr.mxu0 0.0
        %2952 = vmatpush1.msra.mxu0 %v2924
        %2953 = vmatprep.subr.mxu0 0.0
        %2954 = vmatpush1.msra.mxu0 %v2925
        %2955 = vmatprep.subr.mxu0 0.0
        %2956 = vmatpush1.msra.mxu0 %v2926
        %2957 = vmatprep.subr.mxu0 0.0
        %2958 = vmatpush1.msra.mxu0 %v2927
        %2959 = vmatprep.subr.mxu0 0.0
        %2960 = vmatpush1.msra.mxu0 %v2928
        %2961 = vmatprep.subr.mxu0 0.0
        %2962 = vmatpush1.msra.mxu0 %v2929
        %2963 = vmatprep.subr.mxu0 0.0
        %2964 = vmatpush1.msra.mxu0 0.0
        %2965 = vmatprep.subr.mxu0 0.0
        %2966 = vmatpush1.msra.mxu0 0.0
        %2967 = vmatprep.subr.mxu0 0.0
        %2968 = vmatpush1.msra.mxu0 0.0
        %2969 = vmatprep.subr.mxu0 0.0
        %2970 = vmatpush1.msra.mxu0 0.0
        %2971 = vmatprep.subr.mxu0 0.0
        %2972 = vmatpush1.msra.mxu0 0.0
        %2973 = vmatprep.subr.mxu0 0.0
        %2974 = vmatpush1.msra.mxu0 0.0
        %2975 = vmatprep.subr.mxu0 0.0
        %2976 = vmatpush1.msra.mxu0 0.0
        %2977 = vmatprep.subr.mxu0 0.0
        %2978 = vmatpush1.msra.mxu0 0.0
        %2979 = vmatprep.subr.mxu0 0.0
        %2980 = vmatpush1.msra.mxu0 0.0
        %2981 = vmatprep.subr.mxu0 0.0
        %2982 = vmatpush1.msra.mxu0 0.0
        %2983 = vmatprep.subr.mxu0 0.0
        %2984 = vmatpush1.msra.mxu0 0.0
        %2985 = vmatprep.subr.mxu0 0.0
        %2986 = vmatpush1.msra.mxu0 0.0
        %2987 = vmatprep.subr.mxu0 0.0
        %2988 = vmatpush1.msra.mxu0 0.0
        %2989 = vmatprep.subr.mxu0 0.0
        %2990 = vmatpush1.msra.mxu0 0.0
        %2991 = vmatprep.subr.mxu0 0.0
        %2992 = vmatpush1.msra.mxu0 0.0
        %2993 = vmatprep.subr.mxu0 0.0
        %2994 = vmatpush1.msra.mxu0 0.0
        %2995 = vmatprep.mubr.f32.mxu0 0.0
        %2996 = vmatmul.mubr.f32.gmra.mrb[0].mxu0 %v2913
        %v2997 = vpop.f32.mrb[0].mxu0
        %v2998 = vadd.f32 %v2930, %v2997
        %v2999 = vpop.f32.mrb[0].mxu0
        %3000 = vdwg.mxu0
        %vm3001 = vcmask 16384
        %3002 = vst.msk [vmem:[%s378] sm:$0x1] %vm3001, %v2998
        %s3003 = sand.u32 %s269, 1
        %s3004 = scalar_lea.sflag [#allocation4], %s3003
        %s3005 = sand.u32 %s269, 1
        %s3006 = scalar_lea.vmem [#allocation3], %s3005
        // Predicated region
        $region79: #{network_forward.1} parent=63 // pred_check
          %p3007 = pneg %p279
        $region80: #{network_forward.1} parent=63 // pred_check_branch
          %3009 = sbr.rel (%p3007) target = $region82
        $region81: #{network_forward.1} parent=63 // pred_region
          %s3011 = ssub.s32 16, 16
          %3012 = vsyncadd %s3004, %s3011
          %s3013 = smul.addr %s25, 16
          %s3014 = scalar_lea.hbm %s11, %s3013
          %s3016 = sshll.u32 %s3006, 4
          %s3017 = int_to_ptr.vmem [resolvable:$true] %s3016
          %3019 = dma.vmem_to_hbm [thread:$0]  %s3017, 16, %s3014, %s3004
        $region82: #{network_forward.1} parent=63 // pred_fallthru
          _
      $region64: #{network_forward.1} parent=5 // pred_fallthru
        _
      %p3020 = scmp.le.s32.totalorder 2, %s20
      // Predicated region
      $region83: #{network_forward.1} parent=5 // pred_check
        %p3021 = pneg %p3020
      $region84: #{network_forward.1} parent=5 // pred_check_branch
        %3023 = sbr.rel (%p3021) target = $region86
      $region85: #{network_forward.1} parent=5 // pred_region
        %s3024 = ssub.s32 %s20, 2
        // Predicated region
        $region87: #{network_forward.1} parent=85 // pred_check
          %p3025 = pneg %p285
        $region88: #{network_forward.1} parent=85 // pred_check_branch
          %3027 = sbr.rel (%p3025) target = $region90
        $region89: #{network_forward.1} parent=85 // pred_region
          %s3028 = sand.u32 %s270, 1
          %s3029 = scalar_lea.sflag [#allocation4], %s3028
          %s3030 = sand.u32 %s270, 1
          %s3031 = scalar_lea.vmem [#allocation3], %s3030
          %3032 = dma.done %s3029, 16
        $region90: #{network_forward.1} parent=85 // pred_fallthru
          _
      $region86: #{network_forward.1} parent=5 // pred_fallthru
        _
    $region6: #{network_forward.1} parent=1 // loop_footer
      %s24 = sadd.s32 1, %s20
    $region7: #{network_forward.1} parent=1 // loop_footer_branch
      %19 = sbr.rel target = $region3
    $region8: #{network_forward.1} parent=1 // loop_exit
      _
    %3033 = vsyncpa [#allocation4], 1
    %s3034 = scalar_lea.sflag [#allocation4], 1
    %3035 = vsyncpa %s3034, 1

</llo_original>
